<compile_context>
chip_gen: v7x
topology: tpu7x:2x2x1
jax: 0.10.0
libtpu: 0.0.40
codegen_flags: <defaults>
</compile_context>

<pallas_src>
import functools

import jax
import jax.numpy as jnp
from jax.experimental import pallas as pl
from jax.experimental.pallas import tpu as pltpu

PAD = 128                 # lane-dense channel padding granularity
NODE_TILE = 512           # node rows per grid step (encoder / node-update)
EDGE_TILE = 256           # edges per grid step (propagate)
NUM_EDGE_SPLITS = 2       # partial accumulators -> 'parallel' axis for megacore


def _round_up(v, m):
    return (v + m - 1) // m * m


def _default_vmem_limit():
    # Generation-aware VMEM budget: ~85% of per-core capacity, capped at 100 MiB.
    try:
        cap = getattr(pltpu.get_tpu_info(), "vmem_capacity_bytes", None)
        if cap:
            return int(min(cap * 0.85, 100 * 1024 * 1024))
    except Exception:
        pass
    return 48 * 1024 * 1024


VMEM_LIMIT = _default_vmem_limit()


# ----------------------------------------------------------------------------
# Kernel 1: encoder 3-layer MLP (node-tiled; weights resident across the grid)
# ----------------------------------------------------------------------------
def _encoder_kernel(x_ref, w1, b1, w2, b2, w3, b3, o_ref):
    h = jnp.dot(x_ref[...], w1[...], preferred_element_type=jnp.float32) + b1[...]
    h = jnp.maximum(h, 0.0)
    # Dropout(p=0.0) == identity  # TODO(synk): training-mode dropout not implemented
    h = jnp.dot(h.astype(jnp.bfloat16), w2[...],
                preferred_element_type=jnp.float32) + b2[...]
    h = jnp.maximum(h, 0.0)
    h = jnp.dot(h.astype(jnp.bfloat16), w3[...],
                preferred_element_type=jnp.float32) + b3[...]
    o_ref[...] = jnp.maximum(h, 0.0)                      # last_activation=True


# ----------------------------------------------------------------------------
# Kernel 2: GIN-MLP propagate, edge-tiled, split into partial accumulators.
#   gather  : xj = h[src], xi = h[dst]   (batched by 8; src/dst in SMEM)
#   message : mlp_edge(cat([xj, xi]))    (first layer split -> no concat)
#   scatter : aggr += one_hot(dst)^T @ msg   (MXU matmul, no per-edge RMW)
# ----------------------------------------------------------------------------
def _gin_propagate_kernel(src_ref, dst_ref,               # SMEM int32 [S*EPS]
                          dst_row_ref,                    # VMEM int32 [1, TE]
                          h_ref,                          # VMEM f32 [npad, Ph]
                          w1j_ref, w1i_ref, b1_ref,
                          w2_ref, b2_ref, w3_ref, b3_ref,
                          aggr_ref,                       # VMEM f32 [npad, Ph] (resident per split)
                          xj_buf, xi_buf,                 # VMEM f32 scratch [TE, Ph]
                          *, edge_tile, n_edge_tiles, split_real_edges, num_edges):
    split = pl.program_id(0)
    t = pl.program_id(1)

    @pl.when(t == 0)
    def _():
        aggr_ref[...] = jnp.zeros_like(aggr_ref)

    base = pl.multiple_of((split * n_edge_tiles + t) * edge_tile, 8)

    # --- batched index-driven gather: 8 edges per step, full-vreg stores -----
    def gather8(g, carry):
        j0 = pl.multiple_of(g * 8, 8)
        rows_j = []
        rows_i = []
        for u in range(8):
            s_idx = src_ref[base + j0 + u]
            d_idx = dst_ref[base + j0 + u]
            rows_j.append(h_ref[pl.ds(s_idx, 1), :])
            rows_i.append(h_ref[pl.ds(d_idx, 1), :])
        xj_buf[pl.ds(j0, 8), :] = jnp.concatenate(rows_j, axis=0)
        xi_buf[pl.ds(j0, 8), :] = jnp.concatenate(rows_i, axis=0)
        return carry

    jax.lax.fori_loop(0, edge_tile // 8, gather8, 0)

    xj = xj_buf[...].astype(jnp.bfloat16)
    xi = xi_buf[...].astype(jnp.bfloat16)

    # --- edge MLP on the whole tile (bf16 MXU matmuls, f32 accumulation) -----
    m = (jnp.dot(xj, w1j_ref[...], preferred_element_type=jnp.float32)
         + jnp.dot(xi, w1i_ref[...], preferred_element_type=jnp.float32)
         + b1_ref[...])
    m = jnp.maximum(m, 0.0)
    m = jnp.dot(m.astype(jnp.bfloat16), w2_ref[...],
                preferred_element_type=jnp.float32) + b2_ref[...]
    m = jnp.maximum(m, 0.0)
    m = jnp.dot(m.astype(jnp.bfloat16), w3_ref[...],
                preferred_element_type=jnp.float32) + b3_ref[...]
    m = jnp.maximum(m, 0.0)                               # last_activation=True

    # zero messages of padded (non-existent) edges of this split
    cnt = jnp.minimum(jnp.maximum(num_edges - split * split_real_edges, 0),
                      split_real_edges)
    local = t * edge_tile + jax.lax.broadcasted_iota(jnp.int32, m.shape, 0)
    m = jnp.where(local < cnt, m, 0.0)

    # --- scatter-add on the MXU: aggr += one_hot(dst_tile)^T @ msg -----------
    npad = aggr_ref.shape[0]
    node_iota = jax.lax.broadcasted_iota(jnp.int32, (npad, edge_tile), 0)
    onehot_t = (node_iota == dst_row_ref[...]).astype(jnp.bfloat16)
    aggr_ref[...] += jnp.dot(onehot_t, m.astype(jnp.bfloat16),
                             preferred_element_type=jnp.float32)


# ----------------------------------------------------------------------------
# Kernel 3: fused  (1+eps)*h + sum(aggr_splits) -> conv MLP -> decoder
# ----------------------------------------------------------------------------
def _node_update_kernel(scale_ref, h_ref, aggr_ref,
                        cw1, cb1, cw2, cb2, cw3, cb3,
                        dw1, db1, dw2, db2, dw3, db3, o_ref):
    s = scale_ref[0, 0]                                   # (1+eps) SMEM scalar
    aggr = jnp.sum(aggr_ref[...], axis=0)                 # combine split partials
    pre = s * h_ref[...] + aggr
    # conv node-MLP (last_activation=True)
    u = jnp.dot(pre.astype(jnp.bfloat16), cw1[...],
                preferred_element_type=jnp.float32) + cb1[...]
    u = jnp.maximum(u, 0.0)
    u = jnp.dot(u.astype(jnp.bfloat16), cw2[...],
                preferred_element_type=jnp.float32) + cb2[...]
    u = jnp.maximum(u, 0.0)
    u = jnp.dot(u.astype(jnp.bfloat16), cw3[...],
                preferred_element_type=jnp.float32) + cb3[...]
    u = jnp.maximum(u, 0.0)
    # decoder (no last activation)
    y = jnp.dot(u.astype(jnp.bfloat16), dw1[...],
                preferred_element_type=jnp.float32) + db1[...]
    y = jnp.maximum(y, 0.0)
    y = jnp.dot(y.astype(jnp.bfloat16), dw2[...],
                preferred_element_type=jnp.float32) + db2[...]
    y = jnp.maximum(y, 0.0)
    y = jnp.dot(y.astype(jnp.bfloat16), dw3[...],
                preferred_element_type=jnp.float32) + db3[...]
    o_ref[...] = y


# ----------------------------------------------------------------------------
# pallas_call wrappers
# ----------------------------------------------------------------------------
def _run_encoder(x_p, enc_p, tn, grid_n):
    w1, b1, w2, b2, w3, b3 = enc_p
    npad = x_p.shape[0]
    hid_out = w3.shape[1]
    in_specs = [pl.BlockSpec((tn, x_p.shape[1]), lambda i: (i, 0))]
    for a in (w1, b1, w2, b2, w3, b3):
        in_specs.append(pl.BlockSpec(a.shape, lambda i: (0, 0)))
    return pl.pallas_call(
        _encoder_kernel,
        out_shape=jax.ShapeDtypeStruct((npad, hid_out), jnp.float32),
        grid_spec=pltpu.PrefetchScalarGridSpec(
            num_scalar_prefetch=0,
            grid=(grid_n,),
            in_specs=in_specs,
            out_specs=pl.BlockSpec((tn, hid_out), lambda i: (i, 0)),
        ),
        compiler_params=pltpu.CompilerParams(
            dimension_semantics=("parallel",),
            vmem_limit_bytes=VMEM_LIMIT),
    )(x_p, w1, b1, w2, b2, w3, b3)


def _run_propagate(h_p, src_flat, dst_flat, dst_row, edge_p,
                   te, n_edge_tiles, split_real_edges, num_edges):
    w1j, w1i, b1, w2, b2, w3, b3 = edge_p
    npad, ph = h_p.shape
    in_specs = [
        pl.BlockSpec((None, 1, te), lambda s, t, *_: (s, 0, t)),     # dst rows (one-hot)
        pl.BlockSpec((npad, ph), lambda s, t, *_: (0, 0)),           # h resident
    ]
    for a in (w1j, w1i, b1, w2, b2, w3, b3):
        in_specs.append(pl.BlockSpec(a.shape, lambda s, t, *_: (0, 0)))
    kernel = functools.partial(_gin_propagate_kernel,
                               edge_tile=te, n_edge_tiles=n_edge_tiles,
                               split_real_edges=split_real_edges,
                               num_edges=num_edges)
    return pl.pallas_call(
        kernel,
        out_shape=jax.ShapeDtypeStruct((NUM_EDGE_SPLITS, npad, ph), jnp.float32),
        grid_spec=pltpu.PrefetchScalarGridSpec(
            num_scalar_prefetch=2,
            grid=(NUM_EDGE_SPLITS, n_edge_tiles),
            in_specs=in_specs,
            out_specs=pl.BlockSpec((None, npad, ph), lambda s, t, *_: (s, 0, 0)),
            scratch_shapes=[pltpu.VMEM((te, ph), jnp.float32),
                            pltpu.VMEM((te, ph), jnp.float32)],
        ),
        compiler_params=pltpu.CompilerParams(
            dimension_semantics=("parallel", "arbitrary"),
            vmem_limit_bytes=VMEM_LIMIT),
    )(src_flat, dst_flat, dst_row, h_p, w1j, w1i, b1, w2, b2, w3, b3)


def _run_node_update(h_p, aggr_p, scale, conv_p, dec_p, tn, grid_n):
    cw1, cb1, cw2, cb2, cw3, cb3 = conv_p
    dw1, db1, dw2, db2, dw3, db3 = dec_p
    npad, ph = h_p.shape
    out_pad = dw3.shape[1]
    in_specs = [pl.BlockSpec(memory_space=pltpu.MemorySpace.SMEM),       # (1,1) 1+eps
                pl.BlockSpec((tn, ph), lambda i: (i, 0)),
                pl.BlockSpec((NUM_EDGE_SPLITS, tn, ph), lambda i: (0, i, 0))]
    for a in (cw1, cb1, cw2, cb2, cw3, cb3, dw1, db1, dw2, db2, dw3, db3):
        in_specs.append(pl.BlockSpec(a.shape, lambda i: (0, 0)))
    return pl.pallas_call(
        _node_update_kernel,
        out_shape=jax.ShapeDtypeStruct((npad, out_pad), jnp.float32),
        grid_spec=pltpu.PrefetchScalarGridSpec(
            num_scalar_prefetch=0,
            grid=(grid_n,),
            in_specs=in_specs,
            out_specs=pl.BlockSpec((tn, out_pad), lambda i: (i, 0)),
        ),
        compiler_params=pltpu.CompilerParams(
            dimension_semantics=("parallel",),
            vmem_limit_bytes=VMEM_LIMIT),
    )(scale, h_p, aggr_p, cw1, cb1, cw2, cb2, cw3, cb3,
      dw1, db1, dw2, db2, dw3, db3)


# ----------------------------------------------------------------------------
# Parameter init (raw module shapes) + forward wrapper (pads to lane-dense)
# ----------------------------------------------------------------------------
def _init_mlp(key, d_in, d_hid, d_out, scale=0.1):
    k1, k2, k3, k4, k5, k6 = jax.random.split(key, 6)
    w1 = scale * jax.random.normal(k1, (d_in, d_hid), jnp.float32)
    b1 = scale * jax.random.normal(k4, (1, d_hid), jnp.float32)
    w2 = scale * jax.random.normal(k2, (d_hid, d_hid), jnp.float32)
    b2 = scale * jax.random.normal(k5, (1, d_hid), jnp.float32)
    w3 = scale * jax.random.normal(k3, (d_hid, d_out), jnp.float32)
    b3 = scale * jax.random.normal(k6, (1, d_out), jnp.float32)
    return (w1, b1, w2, b2, w3, b3)


def init_params(key, in_channels, hidden, out_channels, factor):
    ks = jax.random.split(key, 4)
    return {
        "encoder": _init_mlp(ks[0], in_channels, factor * hidden, hidden),
        "mlp_edge": _init_mlp(ks[1], 2 * hidden, factor * 2 * hidden, hidden),
        "conv_mlp": _init_mlp(ks[2], hidden, factor * hidden, hidden),
        "decoder": _init_mlp(ks[3], hidden, factor * hidden, out_channels),
        "eps": jnp.zeros((1,), jnp.float32),   # torch.nn.Parameter(torch.Tensor([0]))
    }


def recgnn_forward(x, edge_index, params):
    n, cin = x.shape
    e = edge_index.shape[1]
    hidden = params["conv_mlp"][0].shape[0]
    cout = params["decoder"][4].shape[1]

    # node tiling
    tn = min(NODE_TILE, _round_up(n, 8))
    npad = _round_up(n, tn)

    # edge tiling: split evenly across NUM_EDGE_SPLITS partial accumulators
    split_real = -(-e // NUM_EDGE_SPLITS)                 # ceil(e / splits)
    te = min(EDGE_TILE, _round_up(split_real, 8))
    eps_pad = _round_up(split_real, te)                   # padded edges per split
    n_edge_tiles = eps_pad // te

    # lane-dense zero padding (exact: zero rows/cols + zero bias + ReLU(0)=0)
    pin = _round_up(cin, PAD)
    x_p = jnp.zeros((npad, pin), jnp.bfloat16).at[:n, :cin].set(
        x.astype(jnp.bfloat16))

    # NOTE: no bounds checking on edge_index (must be in [0, n)); padded edges
    # use index 0 but their messages are masked to zero inside the kernel.
    src = edge_index[0].astype(jnp.int32)
    dst = edge_index[1].astype(jnp.int32)
    src_s = jnp.zeros((NUM_EDGE_SPLITS * split_real,), jnp.int32).at[:e].set(src)
    dst_s = jnp.zeros((NUM_EDGE_SPLITS * split_real,), jnp.int32).at[:e].set(dst)
    src_s = src_s.reshape(NUM_EDGE_SPLITS, split_real)
    dst_s = dst_s.reshape(NUM_EDGE_SPLITS, split_real)
    src2 = jnp.zeros((NUM_EDGE_SPLITS, eps_pad), jnp.int32).at[:, :split_real].set(src_s)
    dst2 = jnp.zeros((NUM_EDGE_SPLITS, eps_pad), jnp.int32).at[:, :split_real].set(dst_s)
    src_flat = src2.reshape(-1)                           # SMEM scalars (gather)
    dst_flat = dst2.reshape(-1)                           # SMEM scalars (gather)
    dst_row = dst2.reshape(NUM_EDGE_SPLITS, 1, eps_pad)   # VMEM rows (one-hot scatter)

    def pad_w(w):
        rp = _round_up(w.shape[0], PAD)
        cp = _round_up(w.shape[1], PAD)
        return jnp.zeros((rp, cp), jnp.bfloat16).at[:w.shape[0], :w.shape[1]].set(
            w.astype(jnp.bfloat16))

    def pad_b(b):
        b = b.reshape(1, -1)
        cp = _round_up(b.shape[1], PAD)
        return jnp.zeros((1, cp), jnp.float32).at[:, :b.shape[1]].set(
            b.astype(jnp.float32))

    def pad_mlp(p):
        w1, b1, w2, b2, w3, b3 = p
        return (pad_w(w1), pad_b(b1), pad_w(w2), pad_b(b2), pad_w(w3), pad_b(b3))

    enc_p = pad_mlp(params["encoder"])
    conv_p = pad_mlp(params["conv_mlp"])
    dec_p = pad_mlp(params["decoder"])

    # mlp_edge(cat([x_j, x_i])) : split first layer's weight along its input dim
    we1, be1, we2, be2, we3, be3 = params["mlp_edge"]
    edge_p = (pad_w(we1[:hidden]), pad_w(we1[hidden:]), pad_b(be1),
              pad_w(we2), pad_b(be2), pad_w(we3), pad_b(be3))

    # 1) encoder (node-tiled, bf16 MXU matmuls)
    h_p = _run_encoder(x_p, enc_p, tn, npad // tn)

    # 2) GIN-MLP propagate: batched gather / edge MLP / one-hot MXU scatter-add
    aggr_p = _run_propagate(h_p, src_flat, dst_flat, dst_row, edge_p,
                            te, n_edge_tiles, split_real, e)

    # 3) fused (1+eps)*h + aggr -> conv MLP -> decoder (node-tiled)
    scale = (1.0 + params["eps"]).reshape(1, 1).astype(jnp.float32)
    y_p = _run_node_update(h_p, aggr_p, scale, conv_p, dec_p, tn, npad // tn)

    return y_p[:n, :cout]


# ----------------------------------------------------------------------------
# Pure-JAX (f32) reference for verification
# ----------------------------------------------------------------------------
def _mlp_ref(x, p, last_relu):
    w1, b1, w2, b2, w3, b3 = p
    h = jax.nn.relu(x @ w1 + b1)
    h = jax.nn.relu(h @ w2 + b2)
    h = h @ w3 + b3
    return jax.nn.relu(h) if last_relu else h


def recgnn_reference(x, edge_index, params):
    src, dst = edge_index[0], edge_index[1]
    h = _mlp_ref(x, params["encoder"], True)
    xj, xi = h[src], h[dst]
    msgs = _mlp_ref(jnp.concatenate([xj, xi], axis=1), params["mlp_edge"], True)
    aggr = jnp.zeros_like(h).at[dst].add(msgs)
    pre = (1.0 + params["eps"][0]) * h + aggr
    h = _mlp_ref(pre, params["conv_mlp"], True)
    return _mlp_ref(h, params["decoder"], False)


if __name__ == "__main__":
    N, E = 16, 32            # nodes, edges
    in_channels = 8
    hidden_channels = 32
    out_channels = 8
    hidden_state_factor = 2

    key = jax.random.PRNGKey(0)
    kx, ke, kp = jax.random.split(key, 3)

    x = jax.random.normal(kx, (N, in_channels), jnp.float32)
    edge_index = jax.random.randint(ke, (2, E), 0, N, dtype=jnp.int32)

    params = init_params(kp, in_channels, hidden_channels, out_channels,
                         hidden_state_factor)

    out = jax.jit(recgnn_forward)(x, edge_index, params)
    out = jax.block_until_ready(out)

    ref = jax.block_until_ready(recgnn_reference(x, edge_index, params))
    assert out.shape == (N, out_channels), out.shape
    # bf16 MXU inputs with f32 accumulation vs pure-f32 reference
    if not jnp.allclose(out, ref, atol=3e-2, rtol=3e-2):
        raise AssertionError("Pallas output does not match JAX reference")

    print("KERNEL_OK")
</pallas_src>

<mosaic_0001>
module attributes {stable_mosaic.version = 11 : i64} {
  func.func @_encoder_kernel(%arg0: i32, %arg1: memref<16x128xbf16, #tpu.memory_space<vmem>>, %arg2: memref<128x128xbf16, #tpu.memory_space<vmem>>, %arg3: memref<1x128xf32, #tpu.memory_space<vmem>>, %arg4: memref<128x128xbf16, #tpu.memory_space<vmem>>, %arg5: memref<1x128xf32, #tpu.memory_space<vmem>>, %arg6: memref<128x128xbf16, #tpu.memory_space<vmem>>, %arg7: memref<1x128xf32, #tpu.memory_space<vmem>>, %arg8: memref<16x128xf32, #tpu.memory_space<vmem>>) attributes {dimension_semantics = [#tpu.dimension_semantics<parallel>], iteration_bounds = array<i64: 1>, scalar_prefetch = 0 : i64, scratch_operands = 0 : i64, tpu.core_type = #tpu.core_type<tc>, window_params = [{transform_indices = @transform_0, window_bounds = array<i64: 16, 128>}, {pipeline_mode = #tpu.pipeline_mode<synchronous>, transform_indices = @transform_1, window_bounds = array<i64: 128, 128>}, {pipeline_mode = #tpu.pipeline_mode<synchronous>, transform_indices = @transform_2, window_bounds = array<i64: 1, 128>}, {pipeline_mode = #tpu.pipeline_mode<synchronous>, transform_indices = @transform_3, window_bounds = array<i64: 128, 128>}, {pipeline_mode = #tpu.pipeline_mode<synchronous>, transform_indices = @transform_4, window_bounds = array<i64: 1, 128>}, {pipeline_mode = #tpu.pipeline_mode<synchronous>, transform_indices = @transform_5, window_bounds = array<i64: 128, 128>}, {pipeline_mode = #tpu.pipeline_mode<synchronous>, transform_indices = @transform_6, window_bounds = array<i64: 1, 128>}, {transform_indices = @transform_7, window_bounds = array<i64: 16, 128>}]} {
    %c0 = arith.constant 0 : index
    %c0_0 = arith.constant 0 : index
    %0 = vector.load %arg1[%c0, %c0_0] : memref<16x128xbf16, #tpu.memory_space<vmem>>, vector<16x128xbf16>
    %c0_1 = arith.constant 0 : index
    %c0_2 = arith.constant 0 : index
    %1 = vector.load %arg2[%c0_1, %c0_2] : memref<128x128xbf16, #tpu.memory_space<vmem>>, vector<128x128xbf16>
    %cst = arith.constant dense<0.000000e+00> : vector<16x128xf32>
    %2 = tpu.matmul %0, %1, %cst {dimension_numbers = #tpu.dot_dimension_numbers<[1], [0], [0], [1], [0, 0, 1, 1], [], []>} : vector<16x128xbf16>, vector<128x128xbf16>, vector<16x128xf32> -> vector<16x128xf32>
    %c0_3 = arith.constant 0 : index
    %c0_4 = arith.constant 0 : index
    %3 = vector.load %arg3[%c0_3, %c0_4] : memref<1x128xf32, #tpu.memory_space<vmem>>, vector<1x128xf32>
    %4 = vector.broadcast %3 : vector<1x128xf32> to vector<16x128xf32>
    %5 = arith.addf %2, %4 : vector<16x128xf32>
    %cst_5 = arith.constant 0.000000e+00 : f32
    %6 = vector.broadcast %cst_5 : f32 to vector<16x128xf32>
    %7 = arith.maximumf %5, %6 : vector<16x128xf32>
    %8 = arith.truncf %7 : vector<16x128xf32> to vector<16x128xbf16>
    %c0_6 = arith.constant 0 : index
    %c0_7 = arith.constant 0 : index
    %9 = vector.load %arg4[%c0_6, %c0_7] : memref<128x128xbf16, #tpu.memory_space<vmem>>, vector<128x128xbf16>
    %cst_8 = arith.constant dense<0.000000e+00> : vector<16x128xf32>
    %10 = tpu.matmul %8, %9, %cst_8 {dimension_numbers = #tpu.dot_dimension_numbers<[1], [0], [0], [1], [0, 0, 1, 1], [], []>} : vector<16x128xbf16>, vector<128x128xbf16>, vector<16x128xf32> -> vector<16x128xf32>
    %c0_9 = arith.constant 0 : index
    %c0_10 = arith.constant 0 : index
    %11 = vector.load %arg5[%c0_9, %c0_10] : memref<1x128xf32, #tpu.memory_space<vmem>>, vector<1x128xf32>
    %12 = vector.broadcast %11 : vector<1x128xf32> to vector<16x128xf32>
    %13 = arith.addf %10, %12 : vector<16x128xf32>
    %cst_11 = arith.constant 0.000000e+00 : f32
    %14 = vector.broadcast %cst_11 : f32 to vector<16x128xf32>
    %15 = arith.maximumf %13, %14 : vector<16x128xf32>
    %16 = arith.truncf %15 : vector<16x128xf32> to vector<16x128xbf16>
    %c0_12 = arith.constant 0 : index
    %c0_13 = arith.constant 0 : index
    %17 = vector.load %arg6[%c0_12, %c0_13] : memref<128x128xbf16, #tpu.memory_space<vmem>>, vector<128x128xbf16>
    %cst_14 = arith.constant dense<0.000000e+00> : vector<16x128xf32>
    %18 = tpu.matmul %16, %17, %cst_14 {dimension_numbers = #tpu.dot_dimension_numbers<[1], [0], [0], [1], [0, 0, 1, 1], [], []>} : vector<16x128xbf16>, vector<128x128xbf16>, vector<16x128xf32> -> vector<16x128xf32>
    %c0_15 = arith.constant 0 : index
    %c0_16 = arith.constant 0 : index
    %19 = vector.load %arg7[%c0_15, %c0_16] : memref<1x128xf32, #tpu.memory_space<vmem>>, vector<1x128xf32>
    %20 = vector.broadcast %19 : vector<1x128xf32> to vector<16x128xf32>
    %21 = arith.addf %18, %20 : vector<16x128xf32>
    %cst_17 = arith.constant 0.000000e+00 : f32
    %22 = vector.broadcast %cst_17 : f32 to vector<16x128xf32>
    %23 = arith.maximumf %21, %22 : vector<16x128xf32>
    %c0_18 = arith.constant 0 : index
    %c0_19 = arith.constant 0 : index
    %24 = vector.load %arg8[%c0_18, %c0_19] : memref<16x128xf32, #tpu.memory_space<vmem>>, vector<16x128xf32>
    tpu.vector_store %arg8[%c0_18, %c0_19], %23 {strides = array<i32>} : memref<16x128xf32, #tpu.memory_space<vmem>>, vector<16x128xf32>,
    return
  }
  func.func @transform_0(%arg0: i32) -> (i32, i32) {
    %c0_i32 = arith.constant 0 : i32
    %c0_i32_0 = arith.constant 0 : i32
    return %arg0, %c0_i32 : i32, i32
  }
  func.func @transform_1(%arg0: i32) -> (i32, i32) {
    %c0_i32 = arith.constant 0 : i32
    %c0_i32_0 = arith.constant 0 : i32
    %c0_i32_1 = arith.constant 0 : i32
    return %c0_i32, %c0_i32_0 : i32, i32
  }
  func.func @transform_2(%arg0: i32) -> (i32, i32) {
    %c0_i32 = arith.constant 0 : i32
    %c0_i32_0 = arith.constant 0 : i32
    %c0_i32_1 = arith.constant 0 : i32
    return %c0_i32, %c0_i32_0 : i32, i32
  }
  func.func @transform_3(%arg0: i32) -> (i32, i32) {
    %c0_i32 = arith.constant 0 : i32
    %c0_i32_0 = arith.constant 0 : i32
    %c0_i32_1 = arith.constant 0 : i32
    return %c0_i32, %c0_i32_0 : i32, i32
  }
  func.func @transform_4(%arg0: i32) -> (i32, i32) {
    %c0_i32 = arith.constant 0 : i32
    %c0_i32_0 = arith.constant 0 : i32
    %c0_i32_1 = arith.constant 0 : i32
    return %c0_i32, %c0_i32_0 : i32, i32
  }
  func.func @transform_5(%arg0: i32) -> (i32, i32) {
    %c0_i32 = arith.constant 0 : i32
    %c0_i32_0 = arith.constant 0 : i32
    %c0_i32_1 = arith.constant 0 : i32
    return %c0_i32, %c0_i32_0 : i32, i32
  }
  func.func @transform_6(%arg0: i32) -> (i32, i32) {
    %c0_i32 = arith.constant 0 : i32
    %c0_i32_0 = arith.constant 0 : i32
    %c0_i32_1 = arith.constant 0 : i32
    return %c0_i32, %c0_i32_0 : i32, i32
  }
  func.func @transform_7(%arg0: i32) -> (i32, i32) {
    %c0_i32 = arith.constant 0 : i32
    %c0_i32_0 = arith.constant 0 : i32
    return %arg0, %c0_i32 : i32, i32
  }
}

module attributes {stable_mosaic.version = 11 : i64} {
  func.func @_gin_propagate_kernel(%arg0: i32, %arg1: i32, %arg2: memref<32xi32, #tpu.memory_space<smem>>, %arg3: memref<32xi32, #tpu.memory_space<smem>>, %arg4: memref<1x1x16xi32, #tpu.memory_space<vmem>>, %arg5: memref<16x128xf32, #tpu.memory_space<vmem>>, %arg6: memref<128x128xbf16, #tpu.memory_space<vmem>>, %arg7: memref<128x128xbf16, #tpu.memory_space<vmem>>, %arg8: memref<1x128xf32, #tpu.memory_space<vmem>>, %arg9: memref<128x128xbf16, #tpu.memory_space<vmem>>, %arg10: memref<1x128xf32, #tpu.memory_space<vmem>>, %arg11: memref<128x128xbf16, #tpu.memory_space<vmem>>, %arg12: memref<1x128xf32, #tpu.memory_space<vmem>>, %arg13: memref<1x16x128xf32, #tpu.memory_space<vmem>>, %arg14: memref<16x128xf32, #tpu.memory_space<vmem>>, %arg15: memref<16x128xf32, #tpu.memory_space<vmem>>) attributes {dimension_semantics = [#tpu.dimension_semantics<parallel>, #tpu.dimension_semantics<arbitrary>], iteration_bounds = array<i64: 2, 1>, scalar_prefetch = 2 : i64, scratch_operands = 2 : i64, tpu.core_type = #tpu.core_type<tc>, window_params = [{transform_indices = @transform_0, window_bounds = array<i64: 1, 1, 16>}, {pipeline_mode = #tpu.pipeline_mode<synchronous>, transform_indices = @transform_1, window_bounds = array<i64: 16, 128>}, {pipeline_mode = #tpu.pipeline_mode<synchronous>, transform_indices = @transform_2, window_bounds = array<i64: 128, 128>}, {pipeline_mode = #tpu.pipeline_mode<synchronous>, transform_indices = @transform_3, window_bounds = array<i64: 128, 128>}, {pipeline_mode = #tpu.pipeline_mode<synchronous>, transform_indices = @transform_4, window_bounds = array<i64: 1, 128>}, {pipeline_mode = #tpu.pipeline_mode<synchronous>, transform_indices = @transform_5, window_bounds = array<i64: 128, 128>}, {pipeline_mode = #tpu.pipeline_mode<synchronous>, transform_indices = @transform_6, window_bounds = array<i64: 1, 128>}, {pipeline_mode = #tpu.pipeline_mode<synchronous>, transform_indices = @transform_7, window_bounds = array<i64: 128, 128>}, {pipeline_mode = #tpu.pipeline_mode<synchronous>, transform_indices = @transform_8, window_bounds = array<i64: 1, 128>}, {transform_indices = @transform_9, window_bounds = array<i64: 1, 16, 128>}]} {
    %c0_i32 = arith.constant 0 : i32
    %0 = arith.cmpi eq, %arg1, %c0_i32 : i32
    %1 = arith.extui %0 : i1 to i32
    %c0_i32_0 = arith.constant 0 : i32
    %2 = arith.cmpi ne, %1, %c0_i32_0 : i32
    scf.if %2 {
      %cst_42 = arith.constant 0.000000e+00 : f32
      %66 = vector.broadcast %cst_42 : f32 to vector<16x128xf32>
      %c0_43 = arith.constant 0 : index
      %c0_44 = arith.constant 0 : index
      %c0_45 = arith.constant 0 : index
      %67 = vector.load %arg13[%c0_43, %c0_44, %c0_45] : memref<1x16x128xf32, #tpu.memory_space<vmem>>, vector<1x16x128xf32>
      %68 = vector.shape_cast %67 : vector<1x16x128xf32> to vector<16x128xf32>
      %69 = vector.shape_cast %66 : vector<16x128xf32> to vector<1x16x128xf32>
      tpu.vector_store %arg13[%c0_43, %c0_44, %c0_45], %69 {strides = array<i32>} : memref<1x16x128xf32, #tpu.memory_space<vmem>>, vector<1x16x128xf32>,
    } else {
    }
    %c1_i32 = arith.constant 1 : i32
    %3 = arith.muli %arg0, %c1_i32 : i32
    %4 = arith.addi %3, %arg1 : i32
    %c16_i32 = arith.constant 16 : i32
    %5 = arith.muli %4, %c16_i32 : i32
    %6 = tpu.assume_multiple %5, 8 : i32
    %c0_i32_1 = arith.constant 0 : i32
    %c2_i32 = arith.constant 2 : i32
    %7 = arith.addi %c0_i32_1, %c2_i32 : i32
    %c1_i32_2 = arith.constant 1 : i32
    scf.for %arg16 = %c0_i32_1 to %7 step %c1_i32_2  : i32 {
      %c8_i32 = arith.constant 8 : i32
      %66 = arith.muli %arg16, %c8_i32 : i32
      %67 = tpu.assume_multiple %66, 8 : i32
      %68 = arith.addi %6, %67 : i32
      %c0_i32_42 = arith.constant 0 : i32
      %69 = arith.addi %68, %c0_i32_42 : i32
      %70 = arith.index_cast %69 : i32 to index
      %71 = memref.load %arg2[%70] : memref<32xi32, #tpu.memory_space<smem>>
      %72 = arith.addi %6, %67 : i32
      %c0_i32_43 = arith.constant 0 : i32
      %73 = arith.addi %72, %c0_i32_43 : i32
      %74 = arith.index_cast %73 : i32 to index
      %75 = memref.load %arg3[%74] : memref<32xi32, #tpu.memory_space<smem>>
      %76 = arith.index_cast %71 : i32 to index
      %c0_44 = arith.constant 0 : index
      %77 = vector.load %arg5[%76, %c0_44] : memref<16x128xf32, #tpu.memory_space<vmem>>, vector<1x128xf32>
      %78 = arith.index_cast %75 : i32 to index
      %c0_45 = arith.constant 0 : index
      %79 = vector.load %arg5[%78, %c0_45] : memref<16x128xf32, #tpu.memory_space<vmem>>, vector<1x128xf32>
      %80 = arith.addi %6, %67 : i32
      %c1_i32_46 = arith.constant 1 : i32
      %81 = arith.addi %80, %c1_i32_46 : i32
      %82 = arith.index_cast %81 : i32 to index
      %83 = memref.load %arg2[%82] : memref<32xi32, #tpu.memory_space<smem>>
      %84 = arith.addi %6, %67 : i32
      %c1_i32_47 = arith.constant 1 : i32
      %85 = arith.addi %84, %c1_i32_47 : i32
      %86 = arith.index_cast %85 : i32 to index
      %87 = memref.load %arg3[%86] : memref<32xi32, #tpu.memory_space<smem>>
      %88 = arith.index_cast %83 : i32 to index
      %c0_48 = arith.constant 0 : index
      %89 = vector.load %arg5[%88, %c0_48] : memref<16x128xf32, #tpu.memory_space<vmem>>, vector<1x128xf32>
      %90 = arith.index_cast %87 : i32 to index
      %c0_49 = arith.constant 0 : index
      %91 = vector.load %arg5[%90, %c0_49] : memref<16x128xf32, #tpu.memory_space<vmem>>, vector<1x128xf32>
      %92 = arith.addi %6, %67 : i32
      %c2_i32_50 = arith.constant 2 : i32
      %93 = arith.addi %92, %c2_i32_50 : i32
      %94 = arith.index_cast %93 : i32 to index
      %95 = memref.load %arg2[%94] : memref<32xi32, #tpu.memory_space<smem>>
      %96 = arith.addi %6, %67 : i32
      %c2_i32_51 = arith.constant 2 : i32
      %97 = arith.addi %96, %c2_i32_51 : i32
      %98 = arith.index_cast %97 : i32 to index
      %99 = memref.load %arg3[%98] : memref<32xi32, #tpu.memory_space<smem>>
      %100 = arith.index_cast %95 : i32 to index
      %c0_52 = arith.constant 0 : index
      %101 = vector.load %arg5[%100, %c0_52] : memref<16x128xf32, #tpu.memory_space<vmem>>, vector<1x128xf32>
      %102 = arith.index_cast %99 : i32 to index
      %c0_53 = arith.constant 0 : index
      %103 = vector.load %arg5[%102, %c0_53] : memref<16x128xf32, #tpu.memory_space<vmem>>, vector<1x128xf32>
      %104 = arith.addi %6, %67 : i32
      %c3_i32 = arith.constant 3 : i32
      %105 = arith.addi %104, %c3_i32 : i32
      %106 = arith.index_cast %105 : i32 to index
      %107 = memref.load %arg2[%106] : memref<32xi32, #tpu.memory_space<smem>>
      %108 = arith.addi %6, %67 : i32
      %c3_i32_54 = arith.constant 3 : i32
      %109 = arith.addi %108, %c3_i32_54 : i32
      %110 = arith.index_cast %109 : i32 to index
      %111 = memref.load %arg3[%110] : memref<32xi32, #tpu.memory_space<smem>>
      %112 = arith.index_cast %107 : i32 to index
      %c0_55 = arith.constant 0 : index
      %113 = vector.load %arg5[%112, %c0_55] : memref<16x128xf32, #tpu.memory_space<vmem>>, vector<1x128xf32>
      %114 = arith.index_cast %111 : i32 to index
      %c0_56 = arith.constant 0 : index
      %115 = vector.load %arg5[%114, %c0_56] : memref<16x128xf32, #tpu.memory_space<vmem>>, vector<1x128xf32>
      %116 = arith.addi %6, %67 : i32
      %c4_i32 = arith.constant 4 : i32
      %117 = arith.addi %116, %c4_i32 : i32
      %118 = arith.index_cast %117 : i32 to index
      %119 = memref.load %arg2[%118] : memref<32xi32, #tpu.memory_space<smem>>
      %120 = arith.addi %6, %67 : i32
      %c4_i32_57 = arith.constant 4 : i32
      %121 = arith.addi %120, %c4_i32_57 : i32
      %122 = arith.index_cast %121 : i32 to index
      %123 = memref.load %arg3[%122] : memref<32xi32, #tpu.memory_space<smem>>
      %124 = arith.index_cast %119 : i32 to index
      %c0_58 = arith.constant 0 : index
      %125 = vector.load %arg5[%124, %c0_58] : memref<16x128xf32, #tpu.memory_space<vmem>>, vector<1x128xf32>
      %126 = arith.index_cast %123 : i32 to index
      %c0_59 = arith.constant 0 : index
      %127 = vector.load %arg5[%126, %c0_59] : memref<16x128xf32, #tpu.memory_space<vmem>>, vector<1x128xf32>
      %128 = arith.addi %6, %67 : i32
      %c5_i32 = arith.constant 5 : i32
      %129 = arith.addi %128, %c5_i32 : i32
      %130 = arith.index_cast %129 : i32 to index
      %131 = memref.load %arg2[%130] : memref<32xi32, #tpu.memory_space<smem>>
      %132 = arith.addi %6, %67 : i32
      %c5_i32_60 = arith.constant 5 : i32
      %133 = arith.addi %132, %c5_i32_60 : i32
      %134 = arith.index_cast %133 : i32 to index
      %135 = memref.load %arg3[%134] : memref<32xi32, #tpu.memory_space<smem>>
      %136 = arith.index_cast %131 : i32 to index
      %c0_61 = arith.constant 0 : index
      %137 = vector.load %arg5[%136, %c0_61] : memref<16x128xf32, #tpu.memory_space<vmem>>, vector<1x128xf32>
      %138 = arith.index_cast %135 : i32 to index
      %c0_62 = arith.constant 0 : index
      %139 = vector.load %arg5[%138, %c0_62] : memref<16x128xf32, #tpu.memory_space<vmem>>, vector<1x128xf32>
      %140 = arith.addi %6, %67 : i32
      %c6_i32 = arith.constant 6 : i32
      %141 = arith.addi %140, %c6_i32 : i32
      %142 = arith.index_cast %141 : i32 to index
      %143 = memref.load %arg2[%142] : memref<32xi32, #tpu.memory_space<smem>>
      %144 = arith.addi %6, %67 : i32
      %c6_i32_63 = arith.constant 6 : i32
      %145 = arith.addi %144, %c6_i32_63 : i32
      %146 = arith.index_cast %145 : i32 to index
      %147 = memref.load %arg3[%146] : memref<32xi32, #tpu.memory_space<smem>>
      %148 = arith.index_cast %143 : i32 to index
      %c0_64 = arith.constant 0 : index
      %149 = vector.load %arg5[%148, %c0_64] : memref<16x128xf32, #tpu.memory_space<vmem>>, vector<1x128xf32>
      %150 = arith.index_cast %147 : i32 to index
      %c0_65 = arith.constant 0 : index
      %151 = vector.load %arg5[%150, %c0_65] : memref<16x128xf32, #tpu.memory_space<vmem>>, vector<1x128xf32>
      %152 = arith.addi %6, %67 : i32
      %c7_i32 = arith.constant 7 : i32
      %153 = arith.addi %152, %c7_i32 : i32
      %154 = arith.index_cast %153 : i32 to index
      %155 = memref.load %arg2[%154] : memref<32xi32, #tpu.memory_space<smem>>
      %156 = arith.addi %6, %67 : i32
      %c7_i32_66 = arith.constant 7 : i32
      %157 = arith.addi %156, %c7_i32_66 : i32
      %158 = arith.index_cast %157 : i32 to index
      %159 = memref.load %arg3[%158] : memref<32xi32, #tpu.memory_space<smem>>
      %160 = arith.index_cast %155 : i32 to index
      %c0_67 = arith.constant 0 : index
      %161 = vector.load %arg5[%160, %c0_67] : memref<16x128xf32, #tpu.memory_space<vmem>>, vector<1x128xf32>
      %162 = arith.index_cast %159 : i32 to index
      %c0_68 = arith.constant 0 : index
      %163 = vector.load %arg5[%162, %c0_68] : memref<16x128xf32, #tpu.memory_space<vmem>>, vector<1x128xf32>
      %164 = tpu.concatenate %77, %89, %101, %113, %125, %137, %149, %161 in 0 : vector<1x128xf32>, vector<1x128xf32>, vector<1x128xf32>, vector<1x128xf32>, vector<1x128xf32>, vector<1x128xf32>, vector<1x128xf32>, vector<1x128xf32> -> vector<8x128xf32>
      %165 = arith.index_cast %67 : i32 to index
      %c0_69 = arith.constant 0 : index
      %166 = vector.load %arg14[%165, %c0_69] : memref<16x128xf32, #tpu.memory_space<vmem>>, vector<8x128xf32>
      tpu.vector_store %arg14[%165, %c0_69], %164 {strides = array<i32>} : memref<16x128xf32, #tpu.memory_space<vmem>>, vector<8x128xf32>,
      %167 = tpu.concatenate %79, %91, %103, %115, %127, %139, %151, %163 in 0 : vector<1x128xf32>, vector<1x128xf32>, vector<1x128xf32>, vector<1x128xf32>, vector<1x128xf32>, vector<1x128xf32>, vector<1x128xf32>, vector<1x128xf32> -> vector<8x128xf32>
      %168 = arith.index_cast %67 : i32 to index
      %c0_70 = arith.constant 0 : index
      %169 = vector.load %arg15[%168, %c0_70] : memref<16x128xf32, #tpu.memory_space<vmem>>, vector<8x128xf32>
      tpu.vector_store %arg15[%168, %c0_70], %167 {strides = array<i32>} : memref<16x128xf32, #tpu.memory_space<vmem>>, vector<8x128xf32>,
    }
    %c2_i32_3 = arith.constant 2 : i32
    %c0 = arith.constant 0 : index
    %c0_4 = arith.constant 0 : index
    %8 = vector.load %arg14[%c0, %c0_4] : memref<16x128xf32, #tpu.memory_space<vmem>>, vector<16x128xf32>
    %9 = arith.truncf %8 : vector<16x128xf32> to vector<16x128xbf16>
    %c0_5 = arith.constant 0 : index
    %c0_6 = arith.constant 0 : index
    %10 = vector.load %arg15[%c0_5, %c0_6] : memref<16x128xf32, #tpu.memory_space<vmem>>, vector<16x128xf32>
    %11 = arith.truncf %10 : vector<16x128xf32> to vector<16x128xbf16>
    %c0_7 = arith.constant 0 : index
    %c0_8 = arith.constant 0 : index
    %12 = vector.load %arg6[%c0_7, %c0_8] : memref<128x128xbf16, #tpu.memory_space<vmem>>, vector<128x128xbf16>
    %cst = arith.constant dense<0.000000e+00> : vector<16x128xf32>
    %13 = tpu.matmul %9, %12, %cst {dimension_numbers = #tpu.dot_dimension_numbers<[1], [0], [0], [1], [0, 0, 1, 1], [], []>} : vector<16x128xbf16>, vector<128x128xbf16>, vector<16x128xf32> -> vector<16x128xf32>
    %c0_9 = arith.constant 0 : index
    %c0_10 = arith.constant 0 : index
    %14 = vector.load %arg7[%c0_9, %c0_10] : memref<128x128xbf16, #tpu.memory_space<vmem>>, vector<128x128xbf16>
    %cst_11 = arith.constant dense<0.000000e+00> : vector<16x128xf32>
    %15 = tpu.matmul %11, %14, %cst_11 {dimension_numbers = #tpu.dot_dimension_numbers<[1], [0], [0], [1], [0, 0, 1, 1], [], []>} : vector<16x128xbf16>, vector<128x128xbf16>, vector<16x128xf32> -> vector<16x128xf32>
    %16 = arith.addf %13, %15 : vector<16x128xf32>
    %c0_12 = arith.constant 0 : index
    %c0_13 = arith.constant 0 : index
    %17 = vector.load %arg8[%c0_12, %c0_13] : memref<1x128xf32, #tpu.memory_space<vmem>>, vector<1x128xf32>
    %18 = vector.broadcast %17 : vector<1x128xf32> to vector<16x128xf32>
    %19 = arith.addf %16, %18 : vector<16x128xf32>
    %cst_14 = arith.constant 0.000000e+00 : f32
    %20 = vector.broadcast %cst_14 : f32 to vector<16x128xf32>
    %21 = arith.maximumf %19, %20 : vector<16x128xf32>
    %22 = arith.truncf %21 : vector<16x128xf32> to vector<16x128xbf16>
    %c0_15 = arith.constant 0 : index
    %c0_16 = arith.constant 0 : index
    %23 = vector.load %arg9[%c0_15, %c0_16] : memref<128x128xbf16, #tpu.memory_space<vmem>>, vector<128x128xbf16>
    %cst_17 = arith.constant dense<0.000000e+00> : vector<16x128xf32>
    %24 = tpu.matmul %22, %23, %cst_17 {dimension_numbers = #tpu.dot_dimension_numbers<[1], [0], [0], [1], [0, 0, 1, 1], [], []>} : vector<16x128xbf16>, vector<128x128xbf16>, vector<16x128xf32> -> vector<16x128xf32>
    %c0_18 = arith.constant 0 : index
    %c0_19 = arith.constant 0 : index
    %25 = vector.load %arg10[%c0_18, %c0_19] : memref<1x128xf32, #tpu.memory_space<vmem>>, vector<1x128xf32>
    %26 = vector.broadcast %25 : vector<1x128xf32> to vector<16x128xf32>
    %27 = arith.addf %24, %26 : vector<16x128xf32>
    %cst_20 = arith.constant 0.000000e+00 : f32
    %28 = vector.broadcast %cst_20 : f32 to vector<16x128xf32>
    %29 = arith.maximumf %27, %28 : vector<16x128xf32>
    %30 = arith.truncf %29 : vector<16x128xf32> to vector<16x128xbf16>
    %c0_21 = arith.constant 0 : index
    %c0_22 = arith.constant 0 : index
    %31 = vector.load %arg11[%c0_21, %c0_22] : memref<128x128xbf16, #tpu.memory_space<vmem>>, vector<128x128xbf16>
    %cst_23 = arith.constant dense<0.000000e+00> : vector<16x128xf32>
    %32 = tpu.matmul %30, %31, %cst_23 {dimension_numbers = #tpu.dot_dimension_numbers<[1], [0], [0], [1], [0, 0, 1, 1], [], []>} : vector<16x128xbf16>, vector<128x128xbf16>, vector<16x128xf32> -> vector<16x128xf32>
    %c0_24 = arith.constant 0 : index
    %c0_25 = arith.constant 0 : index
    %33 = vector.load %arg12[%c0_24, %c0_25] : memref<1x128xf32, #tpu.memory_space<vmem>>, vector<1x128xf32>
    %34 = vector.broadcast %33 : vector<1x128xf32> to vector<16x128xf32>
    %35 = arith.addf %32, %34 : vector<16x128xf32>
    %cst_26 = arith.constant 0.000000e+00 : f32
    %36 = vector.broadcast %cst_26 : f32 to vector<16x128xf32>
    %37 = arith.maximumf %35, %36 : vector<16x128xf32>
    %c16_i32_27 = arith.constant 16 : i32
    %38 = arith.muli %arg0, %c16_i32_27 : i32
    %c32_i32 = arith.constant 32 : i32
    %39 = arith.subi %c32_i32, %38 : i32
    %c0_i32_28 = arith.constant 0 : i32
    %40 = arith.maxsi %39, %c0_i32_28 : i32
    %c16_i32_29 = arith.constant 16 : i32
    %41 = arith.minsi %40, %c16_i32_29 : i32
    %c16_i32_30 = arith.constant 16 : i32
    %42 = arith.muli %arg1, %c16_i32_30 : i32
    %43 = tpu.iota {dimensions = array<i32: 0>} : vector<16x128xi32>
    %44 = vector.broadcast %42 : i32 to vector<16x128xi32>
    %45 = arith.addi %44, %43 : vector<16x128xi32>
    %46 = vector.broadcast %41 : i32 to vector<16x128xi32>
    %47 = arith.cmpi slt, %45, %46 : vector<16x128xi32>
    %cst_31 = arith.constant 0.000000e+00 : f32
    %48 = vector.broadcast %cst_31 : f32 to vector<16x128xf32>
    %49 = arith.select %47, %37, %48 : vector<16x128xi1>, vector<16x128xf32>
    %50 = tpu.iota {dimensions = array<i32: 0>} : vector<16x16xi32>
    %c0_32 = arith.constant 0 : index
    %c0_33 = arith.constant 0 : index
    %c0_34 = arith.constant 0 : index
    %51 = vector.load %arg4[%c0_32, %c0_33, %c0_34] : memref<1x1x16xi32, #tpu.memory_space<vmem>>, vector<1x1x16xi32>
    %52 = vector.shape_cast %51 : vector<1x1x16xi32> to vector<1x16xi32>
    %53 = vector.broadcast %52 : vector<1x16xi32> to vector<16x16xi32>
    %54 = arith.cmpi eq, %50, %53 : vector<16x16xi32>
    %55 = arith.extui %54 : vector<16x16xi1> to vector<16x16xi32>
    %56 = arith.sitofp %55 : vector<16x16xi32> to vector<16x16xf32>
    %57 = arith.truncf %56 : vector<16x16xf32> to vector<16x16xbf16>
    %c0_35 = arith.constant 0 : index
    %c0_36 = arith.constant 0 : index
    %c0_37 = arith.constant 0 : index
    %58 = vector.load %arg13[%c0_35, %c0_36, %c0_37] : memref<1x16x128xf32, #tpu.memory_space<vmem>>, vector<1x16x128xf32>
    %59 = vector.shape_cast %58 : vector<1x16x128xf32> to vector<16x128xf32>
    %60 = arith.truncf %49 : vector<16x128xf32> to vector<16x128xbf16>
    %cst_38 = arith.constant dense<0.000000e+00> : vector<16x128xf32>
    %61 = tpu.matmul %57, %60, %cst_38 {dimension_numbers = #tpu.dot_dimension_numbers<[1], [0], [0], [1], [0, 0, 1, 1], [], []>} : vector<16x16xbf16>, vector<16x128xbf16>, vector<16x128xf32> -> vector<16x128xf32>
    %62 = arith.addf %59, %61 : vector<16x128xf32>
    %c0_39 = arith.constant 0 : index
    %c0_40 = arith.constant 0 : index
    %c0_41 = arith.constant 0 : index
    %63 = vector.load %arg13[%c0_39, %c0_40, %c0_41] : memref<1x16x128xf32, #tpu.memory_space<vmem>>, vector<1x16x128xf32>
    %64 = vector.shape_cast %63 : vector<1x16x128xf32> to vector<16x128xf32>
    %65 = vector.shape_cast %62 : vector<16x128xf32> to vector<1x16x128xf32>
    tpu.vector_store %arg13[%c0_39, %c0_40, %c0_41], %65 {strides = array<i32>} : memref<1x16x128xf32, #tpu.memory_space<vmem>>, vector<1x16x128xf32>,
    return
  }
  func.func @transform_0(%arg0: i32, %arg1: i32, %arg2: memref<32xi32, #tpu.memory_space<smem>>, %arg3: memref<32xi32, #tpu.memory_space<smem>>) -> (i32, i32, i32) {
    %c0_i32 = arith.constant 0 : i32
    %c0_i32_0 = arith.constant 0 : i32
    return %arg0, %c0_i32, %arg1 : i32, i32, i32
  }
  func.func @transform_1(%arg0: i32, %arg1: i32, %arg2: memref<32xi32, #tpu.memory_space<smem>>, %arg3: memref<32xi32, #tpu.memory_space<smem>>) -> (i32, i32) {
    %c0_i32 = arith.constant 0 : i32
    %c0_i32_0 = arith.constant 0 : i32
    %c0_i32_1 = arith.constant 0 : i32
    return %c0_i32, %c0_i32_0 : i32, i32
  }
  func.func @transform_2(%arg0: i32, %arg1: i32, %arg2: memref<32xi32, #tpu.memory_space<smem>>, %arg3: memref<32xi32, #tpu.memory_space<smem>>) -> (i32, i32) {
    %c0_i32 = arith.constant 0 : i32
    %c0_i32_0 = arith.constant 0 : i32
    %c0_i32_1 = arith.constant 0 : i32
    return %c0_i32, %c0_i32_0 : i32, i32
  }
  func.func @transform_3(%arg0: i32, %arg1: i32, %arg2: memref<32xi32, #tpu.memory_space<smem>>, %arg3: memref<32xi32, #tpu.memory_space<smem>>) -> (i32, i32) {
    %c0_i32 = arith.constant 0 : i32
    %c0_i32_0 = arith.constant 0 : i32
    %c0_i32_1 = arith.constant 0 : i32
    return %c0_i32, %c0_i32_0 : i32, i32
  }
  func.func @transform_4(%arg0: i32, %arg1: i32, %arg2: memref<32xi32, #tpu.memory_space<smem>>, %arg3: memref<32xi32, #tpu.memory_space<smem>>) -> (i32, i32) {
    %c0_i32 = arith.constant 0 : i32
    %c0_i32_0 = arith.constant 0 : i32
    %c0_i32_1 = arith.constant 0 : i32
    return %c0_i32, %c0_i32_0 : i32, i32
  }
  func.func @transform_5(%arg0: i32, %arg1: i32, %arg2: memref<32xi32, #tpu.memory_space<smem>>, %arg3: memref<32xi32, #tpu.memory_space<smem>>) -> (i32, i32) {
    %c0_i32 = arith.constant 0 : i32
    %c0_i32_0 = arith.constant 0 : i32
    %c0_i32_1 = arith.constant 0 : i32
    return %c0_i32, %c0_i32_0 : i32, i32
  }
  func.func @transform_6(%arg0: i32, %arg1: i32, %arg2: memref<32xi32, #tpu.memory_space<smem>>, %arg3: memref<32xi32, #tpu.memory_space<smem>>) -> (i32, i32) {
    %c0_i32 = arith.constant 0 : i32
    %c0_i32_0 = arith.constant 0 : i32
    %c0_i32_1 = arith.constant 0 : i32
    return %c0_i32, %c0_i32_0 : i32, i32
  }
  func.func @transform_7(%arg0: i32, %arg1: i32, %arg2: memref<32xi32, #tpu.memory_space<smem>>, %arg3: memref<32xi32, #tpu.memory_space<smem>>) -> (i32, i32) {
    %c0_i32 = arith.constant 0 : i32
    %c0_i32_0 = arith.constant 0 : i32
    %c0_i32_1 = arith.constant 0 : i32
    return %c0_i32, %c0_i32_0 : i32, i32
  }
  func.func @transform_8(%arg0: i32, %arg1: i32, %arg2: memref<32xi32, #tpu.memory_space<smem>>, %arg3: memref<32xi32, #tpu.memory_space<smem>>) -> (i32, i32) {
    %c0_i32 = arith.constant 0 : i32
    %c0_i32_0 = arith.constant 0 : i32
    %c0_i32_1 = arith.constant 0 : i32
    return %c0_i32, %c0_i32_0 : i32, i32
  }
  func.func @transform_9(%arg0: i32, %arg1: i32, %arg2: memref<32xi32, #tpu.memory_space<smem>>, %arg3: memref<32xi32, #tpu.memory_space<smem>>) -> (i32, i32, i32) {
    %c0_i32 = arith.constant 0 : i32
    %c0_i32_0 = arith.constant 0 : i32
    %c0_i32_1 = arith.constant 0 : i32
    return %arg0, %c0_i32, %c0_i32_0 : i32, i32, i32
  }
}

module attributes {stable_mosaic.version = 11 : i64} {
  func.func @_node_update_kernel(%arg0: i32, %arg1: memref<1x1xf32, #tpu.memory_space<smem>>, %arg2: memref<16x128xf32, #tpu.memory_space<vmem>>, %arg3: memref<2x16x128xf32, #tpu.memory_space<vmem>>, %arg4: memref<128x128xbf16, #tpu.memory_space<vmem>>, %arg5: memref<1x128xf32, #tpu.memory_space<vmem>>, %arg6: memref<128x128xbf16, #tpu.memory_space<vmem>>, %arg7: memref<1x128xf32, #tpu.memory_space<vmem>>, %arg8: memref<128x128xbf16, #tpu.memory_space<vmem>>, %arg9: memref<1x128xf32, #tpu.memory_space<vmem>>, %arg10: memref<128x128xbf16, #tpu.memory_space<vmem>>, %arg11: memref<1x128xf32, #tpu.memory_space<vmem>>, %arg12: memref<128x128xbf16, #tpu.memory_space<vmem>>, %arg13: memref<1x128xf32, #tpu.memory_space<vmem>>, %arg14: memref<128x128xbf16, #tpu.memory_space<vmem>>, %arg15: memref<1x128xf32, #tpu.memory_space<vmem>>, %arg16: memref<16x128xf32, #tpu.memory_space<vmem>>) attributes {dimension_semantics = [#tpu.dimension_semantics<parallel>], iteration_bounds = array<i64: 1>, scalar_prefetch = 0 : i64, scratch_operands = 0 : i64, tpu.core_type = #tpu.core_type<tc>, window_params = [{transform_indices = @transform_0, window_bounds = array<i64: 1, 1>}, {transform_indices = @transform_1, window_bounds = array<i64: 16, 128>}, {transform_indices = @transform_2, window_bounds = array<i64: 2, 16, 128>}, {pipeline_mode = #tpu.pipeline_mode<synchronous>, transform_indices = @transform_3, window_bounds = array<i64: 128, 128>}, {pipeline_mode = #tpu.pipeline_mode<synchronous>, transform_indices = @transform_4, window_bounds = array<i64: 1, 128>}, {pipeline_mode = #tpu.pipeline_mode<synchronous>, transform_indices = @transform_5, window_bounds = array<i64: 128, 128>}, {pipeline_mode = #tpu.pipeline_mode<synchronous>, transform_indices = @transform_6, window_bounds = array<i64: 1, 128>}, {pipeline_mode = #tpu.pipeline_mode<synchronous>, transform_indices = @transform_7, window_bounds = array<i64: 128, 128>}, {pipeline_mode = #tpu.pipeline_mode<synchronous>, transform_indices = @transform_8, window_bounds = array<i64: 1, 128>}, {pipeline_mode = #tpu.pipeline_mode<synchronous>, transform_indices = @transform_9, window_bounds = array<i64: 128, 128>}, {pipeline_mode = #tpu.pipeline_mode<synchronous>, transform_indices = @transform_10, window_bounds = array<i64: 1, 128>}, {pipeline_mode = #tpu.pipeline_mode<synchronous>, transform_indices = @transform_11, window_bounds = array<i64: 128, 128>}, {pipeline_mode = #tpu.pipeline_mode<synchronous>, transform_indices = @transform_12, window_bounds = array<i64: 1, 128>}, {pipeline_mode = #tpu.pipeline_mode<synchronous>, transform_indices = @transform_13, window_bounds = array<i64: 128, 128>}, {pipeline_mode = #tpu.pipeline_mode<synchronous>, transform_indices = @transform_14, window_bounds = array<i64: 1, 128>}, {transform_indices = @transform_15, window_bounds = array<i64: 16, 128>}]} {
    %c0 = arith.constant 0 : index
    %c0_0 = arith.constant 0 : index
    %0 = memref.load %arg1[%c0, %c0_0] : memref<1x1xf32, #tpu.memory_space<smem>>
    %c0_1 = arith.constant 0 : index
    %c0_2 = arith.constant 0 : index
    %c0_3 = arith.constant 0 : index
    %1 = vector.load %arg3[%c0_1, %c0_2, %c0_3] : memref<2x16x128xf32, #tpu.memory_space<vmem>>, vector<2x16x128xf32>
    %cst = arith.constant dense<0.000000e+00> : vector<16x128xf32>
    %2 = vector.multi_reduction <add>, %1, %cst [0] : vector<2x16x128xf32> to vector<16x128xf32>
    %c0_4 = arith.constant 0 : index
    %c0_5 = arith.constant 0 : index
    %3 = vector.load %arg2[%c0_4, %c0_5] : memref<16x128xf32, #tpu.memory_space<vmem>>, vector<16x128xf32>
    %4 = vector.broadcast %0 : f32 to vector<16x128xf32>
    %5 = arith.mulf %4, %3 : vector<16x128xf32>
    %6 = arith.addf %5, %2 : vector<16x128xf32>
    %7 = arith.truncf %6 : vector<16x128xf32> to vector<16x128xbf16>
    %c0_6 = arith.constant 0 : index
    %c0_7 = arith.constant 0 : index
    %8 = vector.load %arg4[%c0_6, %c0_7] : memref<128x128xbf16, #tpu.memory_space<vmem>>, vector<128x128xbf16>
    %cst_8 = arith.constant dense<0.000000e+00> : vector<16x128xf32>
    %9 = tpu.matmul %7, %8, %cst_8 {dimension_numbers = #tpu.dot_dimension_numbers<[1], [0], [0], [1], [0, 0, 1, 1], [], []>} : vector<16x128xbf16>, vector<128x128xbf16>, vector<16x128xf32> -> vector<16x128xf32>
    %c0_9 = arith.constant 0 : index
    %c0_10 = arith.constant 0 : index
    %10 = vector.load %arg5[%c0_9, %c0_10] : memref<1x128xf32, #tpu.memory_space<vmem>>, vector<1x128xf32>
    %11 = vector.broadcast %10 : vector<1x128xf32> to vector<16x128xf32>
    %12 = arith.addf %9, %11 : vector<16x128xf32>
    %cst_11 = arith.constant 0.000000e+00 : f32
    %13 = vector.broadcast %cst_11 : f32 to vector<16x128xf32>
    %14 = arith.maximumf %12, %13 : vector<16x128xf32>
    %15 = arith.truncf %14 : vector<16x128xf32> to vector<16x128xbf16>
    %c0_12 = arith.constant 0 : index
    %c0_13 = arith.constant 0 : index
    %16 = vector.load %arg6[%c0_12, %c0_13] : memref<128x128xbf16, #tpu.memory_space<vmem>>, vector<128x128xbf16>
    %cst_14 = arith.constant dense<0.000000e+00> : vector<16x128xf32>
    %17 = tpu.matmul %15, %16, %cst_14 {dimension_numbers = #tpu.dot_dimension_numbers<[1], [0], [0], [1], [0, 0, 1, 1], [], []>} : vector<16x128xbf16>, vector<128x128xbf16>, vector<16x128xf32> -> vector<16x128xf32>
    %c0_15 = arith.constant 0 : index
    %c0_16 = arith.constant 0 : index
    %18 = vector.load %arg7[%c0_15, %c0_16] : memref<1x128xf32, #tpu.memory_space<vmem>>, vector<1x128xf32>
    %19 = vector.broadcast %18 : vector<1x128xf32> to vector<16x128xf32>
    %20 = arith.addf %17, %19 : vector<16x128xf32>
    %cst_17 = arith.constant 0.000000e+00 : f32
    %21 = vector.broadcast %cst_17 : f32 to vector<16x128xf32>
    %22 = arith.maximumf %20, %21 : vector<16x128xf32>
    %23 = arith.truncf %22 : vector<16x128xf32> to vector<16x128xbf16>
    %c0_18 = arith.constant 0 : index
    %c0_19 = arith.constant 0 : index
    %24 = vector.load %arg8[%c0_18, %c0_19] : memref<128x128xbf16, #tpu.memory_space<vmem>>, vector<128x128xbf16>
    %cst_20 = arith.constant dense<0.000000e+00> : vector<16x128xf32>
    %25 = tpu.matmul %23, %24, %cst_20 {dimension_numbers = #tpu.dot_dimension_numbers<[1], [0], [0], [1], [0, 0, 1, 1], [], []>} : vector<16x128xbf16>, vector<128x128xbf16>, vector<16x128xf32> -> vector<16x128xf32>
    %c0_21 = arith.constant 0 : index
    %c0_22 = arith.constant 0 : index
    %26 = vector.load %arg9[%c0_21, %c0_22] : memref<1x128xf32, #tpu.memory_space<vmem>>, vector<1x128xf32>
    %27 = vector.broadcast %26 : vector<1x128xf32> to vector<16x128xf32>
    %28 = arith.addf %25, %27 : vector<16x128xf32>
    %cst_23 = arith.constant 0.000000e+00 : f32
    %29 = vector.broadcast %cst_23 : f32 to vector<16x128xf32>
    %30 = arith.maximumf %28, %29 : vector<16x128xf32>
    %31 = arith.truncf %30 : vector<16x128xf32> to vector<16x128xbf16>
    %c0_24 = arith.constant 0 : index
    %c0_25 = arith.constant 0 : index
    %32 = vector.load %arg10[%c0_24, %c0_25] : memref<128x128xbf16, #tpu.memory_space<vmem>>, vector<128x128xbf16>
    %cst_26 = arith.constant dense<0.000000e+00> : vector<16x128xf32>
    %33 = tpu.matmul %31, %32, %cst_26 {dimension_numbers = #tpu.dot_dimension_numbers<[1], [0], [0], [1], [0, 0, 1, 1], [], []>} : vector<16x128xbf16>, vector<128x128xbf16>, vector<16x128xf32> -> vector<16x128xf32>
    %c0_27 = arith.constant 0 : index
    %c0_28 = arith.constant 0 : index
    %34 = vector.load %arg11[%c0_27, %c0_28] : memref<1x128xf32, #tpu.memory_space<vmem>>, vector<1x128xf32>
    %35 = vector.broadcast %34 : vector<1x128xf32> to vector<16x128xf32>
    %36 = arith.addf %33, %35 : vector<16x128xf32>
    %cst_29 = arith.constant 0.000000e+00 : f32
    %37 = vector.broadcast %cst_29 : f32 to vector<16x128xf32>
    %38 = arith.maximumf %36, %37 : vector<16x128xf32>
    %39 = arith.truncf %38 : vector<16x128xf32> to vector<16x128xbf16>
    %c0_30 = arith.constant 0 : index
    %c0_31 = arith.constant 0 : index
    %40 = vector.load %arg12[%c0_30, %c0_31] : memref<128x128xbf16, #tpu.memory_space<vmem>>, vector<128x128xbf16>
    %cst_32 = arith.constant dense<0.000000e+00> : vector<16x128xf32>
    %41 = tpu.matmul %39, %40, %cst_32 {dimension_numbers = #tpu.dot_dimension_numbers<[1], [0], [0], [1], [0, 0, 1, 1], [], []>} : vector<16x128xbf16>, vector<128x128xbf16>, vector<16x128xf32> -> vector<16x128xf32>
    %c0_33 = arith.constant 0 : index
    %c0_34 = arith.constant 0 : index
    %42 = vector.load %arg13[%c0_33, %c0_34] : memref<1x128xf32, #tpu.memory_space<vmem>>, vector<1x128xf32>
    %43 = vector.broadcast %42 : vector<1x128xf32> to vector<16x128xf32>
    %44 = arith.addf %41, %43 : vector<16x128xf32>
    %cst_35 = arith.constant 0.000000e+00 : f32
    %45 = vector.broadcast %cst_35 : f32 to vector<16x128xf32>
    %46 = arith.maximumf %44, %45 : vector<16x128xf32>
    %47 = arith.truncf %46 : vector<16x128xf32> to vector<16x128xbf16>
    %c0_36 = arith.constant 0 : index
    %c0_37 = arith.constant 0 : index
    %48 = vector.load %arg14[%c0_36, %c0_37] : memref<128x128xbf16, #tpu.memory_space<vmem>>, vector<128x128xbf16>
    %cst_38 = arith.constant dense<0.000000e+00> : vector<16x128xf32>
    %49 = tpu.matmul %47, %48, %cst_38 {dimension_numbers = #tpu.dot_dimension_numbers<[1], [0], [0], [1], [0, 0, 1, 1], [], []>} : vector<16x128xbf16>, vector<128x128xbf16>, vector<16x128xf32> -> vector<16x128xf32>
    %c0_39 = arith.constant 0 : index
    %c0_40 = arith.constant 0 : index
    %50 = vector.load %arg15[%c0_39, %c0_40] : memref<1x128xf32, #tpu.memory_space<vmem>>, vector<1x128xf32>
    %51 = vector.broadcast %50 : vector<1x128xf32> to vector<16x128xf32>
    %52 = arith.addf %49, %51 : vector<16x128xf32>
    %c0_41 = arith.constant 0 : index
    %c0_42 = arith.constant 0 : index
    %53 = vector.load %arg16[%c0_41, %c0_42] : memref<16x128xf32, #tpu.memory_space<vmem>>, vector<16x128xf32>
    tpu.vector_store %arg16[%c0_41, %c0_42], %52 {strides = array<i32>} : memref<16x128xf32, #tpu.memory_space<vmem>>, vector<16x128xf32>,
    return
  }
  func.func @transform_0(%arg0: i32) -> (i32, i32) {
    %c0_i32 = arith.constant 0 : i32
    %c0_i32_0 = arith.constant 0 : i32
    %c0_i32_1 = arith.constant 0 : i32
    return %c0_i32, %c0_i32_0 : i32, i32
  }
  func.func @transform_1(%arg0: i32) -> (i32, i32) {
    %c0_i32 = arith.constant 0 : i32
    %c0_i32_0 = arith.constant 0 : i32
    return %arg0, %c0_i32 : i32, i32
  }
  func.func @transform_2(%arg0: i32) -> (i32, i32, i32) {
    %c0_i32 = arith.constant 0 : i32
    %c0_i32_0 = arith.constant 0 : i32
    %c0_i32_1 = arith.constant 0 : i32
    return %c0_i32, %arg0, %c0_i32_0 : i32, i32, i32
  }
  func.func @transform_3(%arg0: i32) -> (i32, i32) {
    %c0_i32 = arith.constant 0 : i32
    %c0_i32_0 = arith.constant 0 : i32
    %c0_i32_1 = arith.constant 0 : i32
    return %c0_i32, %c0_i32_0 : i32, i32
  }
  func.func @transform_4(%arg0: i32) -> (i32, i32) {
    %c0_i32 = arith.constant 0 : i32
    %c0_i32_0 = arith.constant 0 : i32
    %c0_i32_1 = arith.constant 0 : i32
    return %c0_i32, %c0_i32_0 : i32, i32
  }
  func.func @transform_5(%arg0: i32) -> (i32, i32) {
    %c0_i32 = arith.constant 0 : i32
    %c0_i32_0 = arith.constant 0 : i32
    %c0_i32_1 = arith.constant 0 : i32
    return %c0_i32, %c0_i32_0 : i32, i32
  }
  func.func @transform_6(%arg0: i32) -> (i32, i32) {
    %c0_i32 = arith.constant 0 : i32
    %c0_i32_0 = arith.constant 0 : i32
    %c0_i32_1 = arith.constant 0 : i32
    return %c0_i32, %c0_i32_0 : i32, i32
  }
  func.func @transform_7(%arg0: i32) -> (i32, i32) {
    %c0_i32 = arith.constant 0 : i32
    %c0_i32_0 = arith.constant 0 : i32
    %c0_i32_1 = arith.constant 0 : i32
    return %c0_i32, %c0_i32_0 : i32, i32
  }
  func.func @transform_8(%arg0: i32) -> (i32, i32) {
    %c0_i32 = arith.constant 0 : i32
    %c0_i32_0 = arith.constant 0 : i32
    %c0_i32_1 = arith.constant 0 : i32
    return %c0_i32, %c0_i32_0 : i32, i32
  }
  func.func @transform_9(%arg0: i32) -> (i32, i32) {
    %c0_i32 = arith.constant 0 : i32
    %c0_i32_0 = arith.constant 0 : i32
    %c0_i32_1 = arith.constant 0 : i32
    return %c0_i32, %c0_i32_0 : i32, i32
  }
  func.func @transform_10(%arg0: i32) -> (i32, i32) {
    %c0_i32 = arith.constant 0 : i32
    %c0_i32_0 = arith.constant 0 : i32
    %c0_i32_1 = arith.constant 0 : i32
    return %c0_i32, %c0_i32_0 : i32, i32
  }
  func.func @transform_11(%arg0: i32) -> (i32, i32) {
    %c0_i32 = arith.constant 0 : i32
    %c0_i32_0 = arith.constant 0 : i32
    %c0_i32_1 = arith.constant 0 : i32
    return %c0_i32, %c0_i32_0 : i32, i32
  }
  func.func @transform_12(%arg0: i32) -> (i32, i32) {
    %c0_i32 = arith.constant 0 : i32
    %c0_i32_0 = arith.constant 0 : i32
    %c0_i32_1 = arith.constant 0 : i32
    return %c0_i32, %c0_i32_0 : i32, i32
  }
  func.func @transform_13(%arg0: i32) -> (i32, i32) {
    %c0_i32 = arith.constant 0 : i32
    %c0_i32_0 = arith.constant 0 : i32
    %c0_i32_1 = arith.constant 0 : i32
    return %c0_i32, %c0_i32_0 : i32, i32
  }
  func.func @transform_14(%arg0: i32) -> (i32, i32) {
    %c0_i32 = arith.constant 0 : i32
    %c0_i32_0 = arith.constant 0 : i32
    %c0_i32_1 = arith.constant 0 : i32
    return %c0_i32, %c0_i32_0 : i32, i32
  }
  func.func @transform_15(%arg0: i32) -> (i32, i32) {
    %c0_i32 = arith.constant 0 : i32
    %c0_i32_0 = arith.constant 0 : i32
    return %arg0, %c0_i32 : i32, i32
  }
}

</mosaic_0001>

<llo_original>
// kernel: recgnn_forward.3
$region0: #{recgnn_forward.3}
  #allocation0 [shape = 'u32[]', space=smem, size = 0x4, offset = 0x4, fixed_abs, tag = 'smem constant byte address 0x4 - core index']
  #allocation1 [shape = 'u32[144,128]{1,0:T(1,128)}', space=vmem, size = 0x12000, scoped, tag = 'internal scratch']
  %s0 = inlined_call_operand.vmem [shape: bf16[16,128], index: 0, kind: input, shape index: {}]
  %s1 = inlined_call_operand.vmem [shape: bf16[128,128], index: 1, kind: input, shape index: {}]
  %s2 = inlined_call_operand.vmem [shape: f32[1,128], index: 2, kind: input, shape index: {}]
  %s3 = inlined_call_operand.vmem [shape: bf16[128,128], index: 3, kind: input, shape index: {}]
  %s4 = inlined_call_operand.vmem [shape: f32[1,128], index: 4, kind: input, shape index: {}]
  %s5 = inlined_call_operand.vmem [shape: bf16[128,128], index: 5, kind: input, shape index: {}]
  %s6 = inlined_call_operand.vmem [shape: f32[1,128], index: 6, kind: input, shape index: {}]
  %s7 = inlined_call_operand.vmem [shape: f32[16,128], index: 7, kind: output, shape index: {}]
  %s8 = sld [smem:[#allocation0]]
  $region38: #{recgnn_forward.3} parent=0
    _
  %s10 = ssub.s32 1, %s8
  %s11 = scalar_select 0, %s10, %s8
  // Predicated region
  $region2: #{recgnn_forward.3} parent=0 // pred_check
    _
  $region3: #{recgnn_forward.3} parent=0 // pred_check_branch
    %13 = sbr.rel (0) target = $region5
  $region4: #{recgnn_forward.3} parent=0 // pred_region
    _
  $region5: #{recgnn_forward.3} parent=0 // pred_fallthru
    _
  // Predicated region
  $region6: #{recgnn_forward.3} parent=0 // pred_check
    _
  $region7: #{recgnn_forward.3} parent=0 // pred_check_branch
    %15 = sbr.rel (0) target = $region9
  $region8: #{recgnn_forward.3} parent=0 // pred_region
    _
  $region9: #{recgnn_forward.3} parent=0 // pred_fallthru
    _
  // Predicated region
  $region10: #{recgnn_forward.3} parent=0 // pred_check
    _
  $region11: #{recgnn_forward.3} parent=0 // pred_check_branch
    %17 = sbr.rel (0) target = $region13
  $region12: #{recgnn_forward.3} parent=0 // pred_region
    _
  $region13: #{recgnn_forward.3} parent=0 // pred_fallthru
    _
  // Predicated region
  $region14: #{recgnn_forward.3} parent=0 // pred_check
    _
  $region15: #{recgnn_forward.3} parent=0 // pred_check_branch
    %19 = sbr.rel (0) target = $region17
  $region16: #{recgnn_forward.3} parent=0 // pred_region
    _
  $region17: #{recgnn_forward.3} parent=0 // pred_fallthru
    _
  // Predicated region
  $region18: #{recgnn_forward.3} parent=0 // pred_check
    _
  $region19: #{recgnn_forward.3} parent=0 // pred_check_branch
    %21 = sbr.rel (0) target = $region21
  $region20: #{recgnn_forward.3} parent=0 // pred_region
    _
  $region21: #{recgnn_forward.3} parent=0 // pred_fallthru
    _
  // Predicated region
  $region22: #{recgnn_forward.3} parent=0 // pred_check
    _
  $region23: #{recgnn_forward.3} parent=0 // pred_check_branch
    %23 = sbr.rel (0) target = $region25
  $region24: #{recgnn_forward.3} parent=0 // pred_region
    _
  $region25: #{recgnn_forward.3} parent=0 // pred_fallthru
    _
  // Predicated region
  $region26: #{recgnn_forward.3} parent=0 // pred_check
    _
  $region27: #{recgnn_forward.3} parent=0 // pred_check_branch
    %25 = sbr.rel (0) target = $region29
  $region28: #{recgnn_forward.3} parent=0 // pred_region
    _
  $region29: #{recgnn_forward.3} parent=0 // pred_fallthru
    _
  %v27 = vld [vmem:[%s0] sm:$0xf]
  %v28 = vld [vmem:[%s0 + $0x4] sm:$0xf]
  %v29 = vld [vmem:[%s1] sm:$0xf]
  %v30 = vld [vmem:[%s1 + $0x4] sm:$0xf]
  %v31 = vld [vmem:[%s1 + $0x8] sm:$0xf]
  %v32 = vld [vmem:[%s1 + $0xc] sm:$0xf]
  %v33 = vld [vmem:[%s1 + $0x10] sm:$0xf]
  %v34 = vld [vmem:[%s1 + $0x14] sm:$0xf]
  %v35 = vld [vmem:[%s1 + $0x18] sm:$0xf]
  %v36 = vld [vmem:[%s1 + $0x1c] sm:$0xf]
  %v37 = vld [vmem:[%s1 + $0x20] sm:$0xf]
  %v38 = vld [vmem:[%s1 + $0x24] sm:$0xf]
  %v39 = vld [vmem:[%s1 + $0x28] sm:$0xf]
  %v40 = vld [vmem:[%s1 + $0x2c] sm:$0xf]
  %v41 = vld [vmem:[%s1 + $0x30] sm:$0xf]
  %v42 = vld [vmem:[%s1 + $0x34] sm:$0xf]
  %v43 = vld [vmem:[%s1 + $0x38] sm:$0xf]
  %v44 = vld [vmem:[%s1 + $0x3c] sm:$0xf]
  %v45 = vld [vmem:[%s2] sm:$0x1]
  %v47 = vlaneseq
  %v48 = vshrl.u32 %v47, 7
  %v49 = vsub.s32 0, %v48
  %v50 = vrot.slane %v45, %v49
  %v54 = vunpack.c.l.b16 %v27
  %v55 = vunpack.c.l.b16 %v28
  %v56 = vpack.c.b16 %v55, %v54
  %v74 = vunpack.c.l.b16 %v29
  %v75 = vunpack.c.l.b16 %v30
  %v76 = vunpack.c.l.b16 %v31
  %v77 = vunpack.c.l.b16 %v32
  %v78 = vunpack.c.l.b16 %v33
  %v79 = vunpack.c.l.b16 %v34
  %v80 = vunpack.c.l.b16 %v35
  %v81 = vunpack.c.l.b16 %v36
  %v82 = vunpack.c.l.b16 %v37
  %v83 = vunpack.c.l.b16 %v38
  %v84 = vunpack.c.l.b16 %v39
  %v85 = vunpack.c.l.b16 %v40
  %v86 = vunpack.c.l.b16 %v41
  %v87 = vunpack.c.l.b16 %v42
  %v88 = vunpack.c.l.b16 %v43
  %v89 = vunpack.c.l.b16 %v44
  %v90 = vpack.c.b16 %v75, %v74
  %v91 = vpack.c.b16 %v77, %v76
  %v92 = vpack.c.b16 %v79, %v78
  %v93 = vpack.c.b16 %v81, %v80
  %v94 = vpack.c.b16 %v83, %v82
  %v95 = vpack.c.b16 %v85, %v84
  %v96 = vpack.c.b16 %v87, %v86
  %v97 = vpack.c.b16 %v89, %v88
  %106 = vmatprep.subr.bf16.mxu0 0
  %107 = vmatpush1.bf16.msra.mxu0 %v90
  %108 = vmatprep.subr.bf16.mxu0 0
  %109 = vmatpush1.bf16.msra.mxu0 %v91
  %110 = vmatprep.subr.bf16.mxu0 0
  %111 = vmatpush1.bf16.msra.mxu0 %v92
  %112 = vmatprep.subr.bf16.mxu0 0
  %113 = vmatpush1.bf16.msra.mxu0 %v93
  %114 = vmatprep.subr.bf16.mxu0 0
  %115 = vmatpush1.bf16.msra.mxu0 %v94
  %116 = vmatprep.subr.bf16.mxu0 0
  %117 = vmatpush1.bf16.msra.mxu0 %v95
  %118 = vmatprep.subr.bf16.mxu0 0
  %119 = vmatpush1.bf16.msra.mxu0 %v96
  %120 = vmatprep.subr.bf16.mxu0 0
  %121 = vmatpush1.bf16.msra.mxu0 %v97
  %122 = vmatprep.subr.bf16.mxu0 0
  %123 = vmatpush1.bf16.msra.mxu0 0
  %124 = vmatprep.subr.bf16.mxu0 0
  %125 = vmatpush1.bf16.msra.mxu0 0
  %126 = vmatprep.subr.bf16.mxu0 0
  %127 = vmatpush1.bf16.msra.mxu0 0
  %128 = vmatprep.subr.bf16.mxu0 0
  %129 = vmatpush1.bf16.msra.mxu0 0
  %130 = vmatprep.subr.bf16.mxu0 0
  %131 = vmatpush1.bf16.msra.mxu0 0
  %132 = vmatprep.subr.bf16.mxu0 0
  %133 = vmatpush1.bf16.msra.mxu0 0
  %134 = vmatprep.subr.bf16.mxu0 0
  %135 = vmatpush1.bf16.msra.mxu0 0
  %136 = vmatprep.subr.bf16.mxu0 0
  %137 = vmatpush1.bf16.msra.mxu0 0
  %138 = vmatprep.mubr.bf16.mxu0 0
  %139 = vmatmul.mubr.bf16.gmra.mrb[0].mxu0 %v56
  %v140 = vpop.f32.mrb[0].mxu0
  %v141 = vadd.f32 %v50, %v140
  %v142 = vpop.f32.mrb[0].mxu0
  %v143 = vpop.f32.mrb[0].mxu0
  %v144 = vadd.f32 %v50, %v143
  %v145 = vpop.f32.mrb[0].mxu0
  %146 = vdwg.mxu0
  %v147 = vmax.f32 %v141, 0.0
  %v148 = vmax.f32 %v144, 0.0
  %v149 = vpack.c.bf16 %v148, %v147
  %v150 = vld [vmem:[%s3] sm:$0xf]
  %v151 = vld [vmem:[%s3 + $0x4] sm:$0xf]
  %v152 = vld [vmem:[%s3 + $0x8] sm:$0xf]
  %v153 = vld [vmem:[%s3 + $0xc] sm:$0xf]
  %v154 = vld [vmem:[%s3 + $0x10] sm:$0xf]
  %v155 = vld [vmem:[%s3 + $0x14] sm:$0xf]
  %v156 = vld [vmem:[%s3 + $0x18] sm:$0xf]
  %v157 = vld [vmem:[%s3 + $0x1c] sm:$0xf]
  %v158 = vld [vmem:[%s3 + $0x20] sm:$0xf]
  %v159 = vld [vmem:[%s3 + $0x24] sm:$0xf]
  %v160 = vld [vmem:[%s3 + $0x28] sm:$0xf]
  %v161 = vld [vmem:[%s3 + $0x2c] sm:$0xf]
  %v162 = vld [vmem:[%s3 + $0x30] sm:$0xf]
  %v163 = vld [vmem:[%s3 + $0x34] sm:$0xf]
  %v164 = vld [vmem:[%s3 + $0x38] sm:$0xf]
  %v165 = vld [vmem:[%s3 + $0x3c] sm:$0xf]
  %v166 = vld [vmem:[%s4] sm:$0x1]
  %v168 = vlaneseq
  %v169 = vshrl.u32 %v168, 7
  %v170 = vsub.s32 0, %v169
  %v171 = vrot.slane %v166, %v170
  %v189 = vunpack.c.l.b16 %v150
  %v190 = vunpack.c.l.b16 %v151
  %v191 = vunpack.c.l.b16 %v152
  %v192 = vunpack.c.l.b16 %v153
  %v193 = vunpack.c.l.b16 %v154
  %v194 = vunpack.c.l.b16 %v155
  %v195 = vunpack.c.l.b16 %v156
  %v196 = vunpack.c.l.b16 %v157
  %v197 = vunpack.c.l.b16 %v158
  %v198 = vunpack.c.l.b16 %v159
  %v199 = vunpack.c.l.b16 %v160
  %v200 = vunpack.c.l.b16 %v161
  %v201 = vunpack.c.l.b16 %v162
  %v202 = vunpack.c.l.b16 %v163
  %v203 = vunpack.c.l.b16 %v164
  %v204 = vunpack.c.l.b16 %v165
  %v205 = vpack.c.b16 %v190, %v189
  %v206 = vpack.c.b16 %v192, %v191
  %v207 = vpack.c.b16 %v194, %v193
  %v208 = vpack.c.b16 %v196, %v195
  %v209 = vpack.c.b16 %v198, %v197
  %v210 = vpack.c.b16 %v200, %v199
  %v211 = vpack.c.b16 %v202, %v201
  %v212 = vpack.c.b16 %v204, %v203
  %221 = vmatprep.subr.bf16.mxu0 0
  %222 = vmatpush1.bf16.msra.mxu0 %v205
  %223 = vmatprep.subr.bf16.mxu0 0
  %224 = vmatpush1.bf16.msra.mxu0 %v206
  %225 = vmatprep.subr.bf16.mxu0 0
  %226 = vmatpush1.bf16.msra.mxu0 %v207
  %227 = vmatprep.subr.bf16.mxu0 0
  %228 = vmatpush1.bf16.msra.mxu0 %v208
  %229 = vmatprep.subr.bf16.mxu0 0
  %230 = vmatpush1.bf16.msra.mxu0 %v209
  %231 = vmatprep.subr.bf16.mxu0 0
  %232 = vmatpush1.bf16.msra.mxu0 %v210
  %233 = vmatprep.subr.bf16.mxu0 0
  %234 = vmatpush1.bf16.msra.mxu0 %v211
  %235 = vmatprep.subr.bf16.mxu0 0
  %236 = vmatpush1.bf16.msra.mxu0 %v212
  %237 = vmatprep.subr.bf16.mxu0 0
  %238 = vmatpush1.bf16.msra.mxu0 0
  %239 = vmatprep.subr.bf16.mxu0 0
  %240 = vmatpush1.bf16.msra.mxu0 0
  %241 = vmatprep.subr.bf16.mxu0 0
  %242 = vmatpush1.bf16.msra.mxu0 0
  %243 = vmatprep.subr.bf16.mxu0 0
  %244 = vmatpush1.bf16.msra.mxu0 0
  %245 = vmatprep.subr.bf16.mxu0 0
  %246 = vmatpush1.bf16.msra.mxu0 0
  %247 = vmatprep.subr.bf16.mxu0 0
  %248 = vmatpush1.bf16.msra.mxu0 0
  %249 = vmatprep.subr.bf16.mxu0 0
  %250 = vmatpush1.bf16.msra.mxu0 0
  %251 = vmatprep.subr.bf16.mxu0 0
  %252 = vmatpush1.bf16.msra.mxu0 0
  %253 = vmatprep.mubr.bf16.mxu0 0
  %254 = vmatmul.mubr.bf16.gmra.mrb[0].mxu0 %v149
  %v255 = vpop.f32.mrb[0].mxu0
  %v256 = vadd.f32 %v171, %v255
  %v257 = vpop.f32.mrb[0].mxu0
  %v258 = vpop.f32.mrb[0].mxu0
  %v259 = vadd.f32 %v171, %v258
  %v260 = vpop.f32.mrb[0].mxu0
  %261 = vdwg.mxu0
  %v262 = vmax.f32 %v256, 0.0
  %v263 = vmax.f32 %v259, 0.0
  %v264 = vpack.c.bf16 %v263, %v262
  %v265 = vld [vmem:[%s5] sm:$0xf]
  %v266 = vld [vmem:[%s5 + $0x4] sm:$0xf]
  %v267 = vld [vmem:[%s5 + $0x8] sm:$0xf]
  %v268 = vld [vmem:[%s5 + $0xc] sm:$0xf]
  %v269 = vld [vmem:[%s5 + $0x10] sm:$0xf]
  %v270 = vld [vmem:[%s5 + $0x14] sm:$0xf]
  %v271 = vld [vmem:[%s5 + $0x18] sm:$0xf]
  %v272 = vld [vmem:[%s5 + $0x1c] sm:$0xf]
  %v273 = vld [vmem:[%s5 + $0x20] sm:$0xf]
  %v274 = vld [vmem:[%s5 + $0x24] sm:$0xf]
  %v275 = vld [vmem:[%s5 + $0x28] sm:$0xf]
  %v276 = vld [vmem:[%s5 + $0x2c] sm:$0xf]
  %v277 = vld [vmem:[%s5 + $0x30] sm:$0xf]
  %v278 = vld [vmem:[%s5 + $0x34] sm:$0xf]
  %v279 = vld [vmem:[%s5 + $0x38] sm:$0xf]
  %v280 = vld [vmem:[%s5 + $0x3c] sm:$0xf]
  %v281 = vld [vmem:[%s6] sm:$0x1]
  %v283 = vlaneseq
  %v284 = vshrl.u32 %v283, 7
  %v285 = vsub.s32 0, %v284
  %v286 = vrot.slane %v281, %v285
  %v304 = vunpack.c.l.b16 %v265
  %v305 = vunpack.c.l.b16 %v266
  %v306 = vunpack.c.l.b16 %v267
  %v307 = vunpack.c.l.b16 %v268
  %v308 = vunpack.c.l.b16 %v269
  %v309 = vunpack.c.l.b16 %v270
  %v310 = vunpack.c.l.b16 %v271
  %v311 = vunpack.c.l.b16 %v272
  %v312 = vunpack.c.l.b16 %v273
  %v313 = vunpack.c.l.b16 %v274
  %v314 = vunpack.c.l.b16 %v275
  %v315 = vunpack.c.l.b16 %v276
  %v316 = vunpack.c.l.b16 %v277
  %v317 = vunpack.c.l.b16 %v278
  %v318 = vunpack.c.l.b16 %v279
  %v319 = vunpack.c.l.b16 %v280
  %v320 = vpack.c.b16 %v305, %v304
  %v321 = vpack.c.b16 %v307, %v306
  %v322 = vpack.c.b16 %v309, %v308
  %v323 = vpack.c.b16 %v311, %v310
  %v324 = vpack.c.b16 %v313, %v312
  %v325 = vpack.c.b16 %v315, %v314
  %v326 = vpack.c.b16 %v317, %v316
  %v327 = vpack.c.b16 %v319, %v318
  %336 = vmatprep.subr.bf16.mxu0 0
  %337 = vmatpush1.bf16.msra.mxu0 %v320
  %338 = vmatprep.subr.bf16.mxu0 0
  %339 = vmatpush1.bf16.msra.mxu0 %v321
  %340 = vmatprep.subr.bf16.mxu0 0
  %341 = vmatpush1.bf16.msra.mxu0 %v322
  %342 = vmatprep.subr.bf16.mxu0 0
  %343 = vmatpush1.bf16.msra.mxu0 %v323
  %344 = vmatprep.subr.bf16.mxu0 0
  %345 = vmatpush1.bf16.msra.mxu0 %v324
  %346 = vmatprep.subr.bf16.mxu0 0
  %347 = vmatpush1.bf16.msra.mxu0 %v325
  %348 = vmatprep.subr.bf16.mxu0 0
  %349 = vmatpush1.bf16.msra.mxu0 %v326
  %350 = vmatprep.subr.bf16.mxu0 0
  %351 = vmatpush1.bf16.msra.mxu0 %v327
  %352 = vmatprep.subr.bf16.mxu0 0
  %353 = vmatpush1.bf16.msra.mxu0 0
  %354 = vmatprep.subr.bf16.mxu0 0
  %355 = vmatpush1.bf16.msra.mxu0 0
  %356 = vmatprep.subr.bf16.mxu0 0
  %357 = vmatpush1.bf16.msra.mxu0 0
  %358 = vmatprep.subr.bf16.mxu0 0
  %359 = vmatpush1.bf16.msra.mxu0 0
  %360 = vmatprep.subr.bf16.mxu0 0
  %361 = vmatpush1.bf16.msra.mxu0 0
  %362 = vmatprep.subr.bf16.mxu0 0
  %363 = vmatpush1.bf16.msra.mxu0 0
  %364 = vmatprep.subr.bf16.mxu0 0
  %365 = vmatpush1.bf16.msra.mxu0 0
  %366 = vmatprep.subr.bf16.mxu0 0
  %367 = vmatpush1.bf16.msra.mxu0 0
  %368 = vmatprep.mubr.bf16.mxu0 0
  %369 = vmatmul.mubr.bf16.gmra.mrb[0].mxu0 %v264
  %v370 = vpop.f32.mrb[0].mxu0
  %v371 = vadd.f32 %v286, %v370
  %v372 = vpop.f32.mrb[0].mxu0
  %v373 = vpop.f32.mrb[0].mxu0
  %v374 = vadd.f32 %v286, %v373
  %v375 = vpop.f32.mrb[0].mxu0
  %376 = vdwg.mxu0
  %v377 = vmax.f32 %v371, 0.0
  %v378 = vmax.f32 %v374, 0.0
  %379 = vst [vmem:[%s7] sm:$0xff] %v377
  %380 = vst [vmem:[%s7 + $0x8] sm:$0xff] %v378
  // Predicated region
  $region30: #{recgnn_forward.3} parent=0 // pred_check
    _
  $region31: #{recgnn_forward.3} parent=0 // pred_check_branch
    %382 = sbr.rel (0) target = $region33
  $region32: #{recgnn_forward.3} parent=0 // pred_region
    _
  $region33: #{recgnn_forward.3} parent=0 // pred_fallthru
    _
  // Predicated region
  $region34: #{recgnn_forward.3} parent=0 // pred_check
    _
  $region35: #{recgnn_forward.3} parent=0 // pred_check_branch
    %384 = sbr.rel (0) target = $region37
  $region36: #{recgnn_forward.3} parent=0 // pred_region
    _
  $region37: #{recgnn_forward.3} parent=0 // pred_fallthru
    _

// kernel: recgnn_forward.4
$region0: #{recgnn_forward.4}
  #allocation0 [shape = 'u32[]', space=smem, size = 0x4, offset = 0x4, fixed_abs, tag = 'smem constant byte address 0x4 - core index']
  #allocation1 [shape = 'u32[144,128]{1,0:T(1,128)}', space=vmem, size = 0x12000, scoped, tag = 'internal scratch']
  #allocation2 [shape = 'f32[16,128]{1,0:T(8,128)}', space=vmem, size = 0x2000, scoped, tag = 'scratch operand']
  #allocation3 [shape = 'f32[16,128]{1,0:T(8,128)}', space=vmem, size = 0x2000, scoped, tag = 'scratch operand']
  #allocation4 [shape = 's32[1]{0}', space=sflag, size = 0x4, scoped, tag = 'scoped memory for recgnn_forward.4']
  #allocation5 [shape = 'u8[512]{0}', space=smem, size = 0x200, scoped, tag = 'prefetched SMEM operand 0']
  #allocation6 [shape = 'u8[512]{0}', space=smem, size = 0x200, scoped, tag = 'prefetched SMEM operand 1']
  %s0 = inlined_call_operand.vmem [shape: s32[32], index: 0, kind: input, shape index: {}]
  %s1 = inlined_call_operand.vmem [shape: s32[32], index: 1, kind: input, shape index: {}]
  %s2 = inlined_call_operand.vmem [shape: s32[2,1,16], index: 2, kind: input, shape index: {}]
  %s3 = inlined_call_operand.vmem [shape: f32[16,128], index: 3, kind: input, shape index: {}]
  %s4 = inlined_call_operand.vmem [shape: bf16[128,128], index: 4, kind: input, shape index: {}]
  %s5 = inlined_call_operand.vmem [shape: bf16[128,128], index: 5, kind: input, shape index: {}]
  %s6 = inlined_call_operand.vmem [shape: f32[1,128], index: 6, kind: input, shape index: {}]
  %s7 = inlined_call_operand.vmem [shape: bf16[128,128], index: 7, kind: input, shape index: {}]
  %s8 = inlined_call_operand.vmem [shape: f32[1,128], index: 8, kind: input, shape index: {}]
  %s9 = inlined_call_operand.vmem [shape: bf16[128,128], index: 9, kind: input, shape index: {}]
  %s10 = inlined_call_operand.vmem [shape: f32[1,128], index: 10, kind: input, shape index: {}]
  %s11 = inlined_call_operand.vmem [shape: f32[2,16,128], index: 11, kind: output, shape index: {}]
  %s12 = sld [smem:[#allocation0]]
  $region80: #{recgnn_forward.4} parent=0
    _
  %s14 = ssub.s32 1, %s12
  %s15 = scalar_select 0, %s14, %s12
  %s16 = sshll.u32 %s0, 4
  %s17 = int_to_ptr.vmem [resolvable:$true] %s16
  %19 = dma.vmem_to_smem %s17, 16, [#allocation5], [#allocation4]
  %s20 = sshll.u32 %s1, 4
  %s21 = int_to_ptr.vmem [resolvable:$true] %s20
  %23 = dma.vmem_to_smem %s21, 16, [#allocation6], [#allocation4]
  %24 = dma.done [#allocation4], 32
  %25 = sfence
  loop: start=0, step=1, limit=4
  $region2: #{recgnn_forward.4} parent=0 // loop_pre_header
    _
  $region3: #{recgnn_forward.4} parent=0 // loop_header
    %s27 = sphi 0, %s31
    %p28 = scmp.ge.s32.totalorder %s27, 4
    %s34 = sphi 0, %s46
    %s35 = sphi 0, %s42
    %s36 = sphi 0, %s34
    %s37 = sphi 0, %s35
    %s38 = sphi 0, %s36
    %s39 = sphi 0, %s37
    %s51 = sphi 0, %s53
    %s54 = sphi 0, %s51
    %s55 = sphi 0, %s54
    %s71 = sphi 0, %s55
    %s75 = sphi 0, %s75
    %s77 = sphi 0, %s75
    %s78 = sphi 0, %s77
    %s92 = sphi 0, %s78
    %s96 = sphi 0, %s96
    %s98 = sphi 0, %s96
    %s99 = sphi 0, %s98
    %s113 = sphi 0, %s99
    %s117 = sphi 0, %s117
    %s119 = sphi 0, %s117
    %s120 = sphi 0, %s119
    %s134 = sphi 0, %s120
    %s138 = sphi 0, %s138
    %s140 = sphi 0, %s138
    %s141 = sphi 0, %s140
    %s155 = sphi 0, %s141
    %s159 = sphi 0, %s159
    %s161 = sphi 0, %s159
    %s162 = sphi 0, %s161
    %s176 = sphi 0, %s162
    %s180 = sphi 0, %s180
    %s182 = sphi 0, %s180
    %s183 = sphi 0, %s182
    %s197 = sphi 0, %s183
    %s201 = sphi 0, %s201
    %s203 = sphi 0, %s201
    %s204 = sphi 0, %s203
    %s218 = sphi 0, %s204
    %s222 = sphi 0, %s222
    %s224 = sphi 0, %s222
    %s225 = sphi 0, %s224
    %s239 = sphi 0, %s225
    %s245 = sphi 0, %s247
    %s248 = sphi 0, %s245
    %s249 = sphi 0, %s248
    %s265 = sphi 0, %s249
  $region4: #{recgnn_forward.4} parent=0 // loop_header_branch
    %30 = sbr.rel (%p28) target = $region8
  $region5: #{recgnn_forward.4} parent=0 // loop_body
    %s32 = ssub.s32 %s27, 1
    %s33 = ssub.s32 %s27, 2
    %s40 = sadd.s32 1, %s35
    %p41 = scmp.ge.s32.totalorder %s40, 1
    %s42 = scalar_select %p41, 0, %s40
    %s43 = sadd.s32 1, %s34
    %s44 = scalar_select %p41, %s43, %s34
    %p45 = scmp.ge.s32.totalorder %s44, 2
    %s46 = scalar_select %p45, 0, %s44
    %s47 = ssub.s32 %s34, %s46
    %s48 = ssub.s32 %s35, %s42
    %s49 = sor.u32 %s47, %s48
    %p50 = scmp.eq.s32.totalorder %s49, 0
    %s52 = sadd.s32 %s51, 1
    %s53 = scalar_select %p50, %s51, %s52
    %p56 = pneg %p50
    %p57 = scmp.eq.s32.totalorder %s27, 1
    %p58 = por %p56, %p57
    %p59 = scmp.ne.s32.totalorder %s51, %s54
    %p60 = scmp.eq.s32.totalorder %s27, 0
    %p61 = por %p59, %p60
    %p62 = scmp.ne.s32.totalorder %s51, %s54
    %p63 = scmp.eq.s32.totalorder %s32, 1
    %p64 = por %p62, %p63
    %p65 = scmp.ne.s32.totalorder %s54, %s55
    %p66 = scmp.eq.s32.totalorder %s32, 0
    %p67 = por %p65, %p66
    %p68 = scmp.ne.s32.totalorder %s54, %s55
    %p69 = scmp.eq.s32.totalorder %s33, 1
    %p70 = por %p68, %p69
    %p72 = scmp.ne.s32.totalorder %s55, %s71
    %p73 = scmp.eq.s32.totalorder %s33, 0
    %p74 = por %p72, %p73
    %s76 = sadd.s32 %s75, 1
    %p79 = scmp.eq.s32.totalorder %s27, 1
    %p80 = scmp.ne.s32.totalorder %s75, %s77
    %p81 = scmp.eq.s32.totalorder %s27, 0
    %p82 = por %p80, %p81
    %p83 = scmp.ne.s32.totalorder %s75, %s77
    %p84 = scmp.eq.s32.totalorder %s32, 1
    %p85 = por %p83, %p84
    %p86 = scmp.ne.s32.totalorder %s77, %s78
    %p87 = scmp.eq.s32.totalorder %s32, 0
    %p88 = por %p86, %p87
    %p89 = scmp.ne.s32.totalorder %s77, %s78
    %p90 = scmp.eq.s32.totalorder %s33, 1
    %p91 = por %p89, %p90
    %p93 = scmp.ne.s32.totalorder %s78, %s92
    %p94 = scmp.eq.s32.totalorder %s33, 0
    %p95 = por %p93, %p94
    %s97 = sadd.s32 %s96, 1
    %p100 = scmp.eq.s32.totalorder %s27, 1
    %p101 = scmp.ne.s32.totalorder %s96, %s98
    %p102 = scmp.eq.s32.totalorder %s27, 0
    %p103 = por %p101, %p102
    %p104 = scmp.ne.s32.totalorder %s96, %s98
    %p105 = scmp.eq.s32.totalorder %s32, 1
    %p106 = por %p104, %p105
    %p107 = scmp.ne.s32.totalorder %s98, %s99
    %p108 = scmp.eq.s32.totalorder %s32, 0
    %p109 = por %p107, %p108
    %p110 = scmp.ne.s32.totalorder %s98, %s99
    %p111 = scmp.eq.s32.totalorder %s33, 1
    %p112 = por %p110, %p111
    %p114 = scmp.ne.s32.totalorder %s99, %s113
    %p115 = scmp.eq.s32.totalorder %s33, 0
    %p116 = por %p114, %p115
    %s118 = sadd.s32 %s117, 1
    %p121 = scmp.eq.s32.totalorder %s27, 1
    %p122 = scmp.ne.s32.totalorder %s117, %s119
    %p123 = scmp.eq.s32.totalorder %s27, 0
    %p124 = por %p122, %p123
    %p125 = scmp.ne.s32.totalorder %s117, %s119
    %p126 = scmp.eq.s32.totalorder %s32, 1
    %p127 = por %p125, %p126
    %p128 = scmp.ne.s32.totalorder %s119, %s120
    %p129 = scmp.eq.s32.totalorder %s32, 0
    %p130 = por %p128, %p129
    %p131 = scmp.ne.s32.totalorder %s119, %s120
    %p132 = scmp.eq.s32.totalorder %s33, 1
    %p133 = por %p131, %p132
    %p135 = scmp.ne.s32.totalorder %s120, %s134
    %p136 = scmp.eq.s32.totalorder %s33, 0
    %p137 = por %p135, %p136
    %s139 = sadd.s32 %s138, 1
    %p142 = scmp.eq.s32.totalorder %s27, 1
    %p143 = scmp.ne.s32.totalorder %s138, %s140
    %p144 = scmp.eq.s32.totalorder %s27, 0
    %p145 = por %p143, %p144
    %p146 = scmp.ne.s32.totalorder %s138, %s140
    %p147 = scmp.eq.s32.totalorder %s32, 1
    %p148 = por %p146, %p147
    %p149 = scmp.ne.s32.totalorder %s140, %s141
    %p150 = scmp.eq.s32.totalorder %s32, 0
    %p151 = por %p149, %p150
    %p152 = scmp.ne.s32.totalorder %s140, %s141
    %p153 = scmp.eq.s32.totalorder %s33, 1
    %p154 = por %p152, %p153
    %p156 = scmp.ne.s32.totalorder %s141, %s155
    %p157 = scmp.eq.s32.totalorder %s33, 0
    %p158 = por %p156, %p157
    %s160 = sadd.s32 %s159, 1
    %p163 = scmp.eq.s32.totalorder %s27, 1
    %p164 = scmp.ne.s32.totalorder %s159, %s161
    %p165 = scmp.eq.s32.totalorder %s27, 0
    %p166 = por %p164, %p165
    %p167 = scmp.ne.s32.totalorder %s159, %s161
    %p168 = scmp.eq.s32.totalorder %s32, 1
    %p169 = por %p167, %p168
    %p170 = scmp.ne.s32.totalorder %s161, %s162
    %p171 = scmp.eq.s32.totalorder %s32, 0
    %p172 = por %p170, %p171
    %p173 = scmp.ne.s32.totalorder %s161, %s162
    %p174 = scmp.eq.s32.totalorder %s33, 1
    %p175 = por %p173, %p174
    %p177 = scmp.ne.s32.totalorder %s162, %s176
    %p178 = scmp.eq.s32.totalorder %s33, 0
    %p179 = por %p177, %p178
    %s181 = sadd.s32 %s180, 1
    %p184 = scmp.eq.s32.totalorder %s27, 1
    %p185 = scmp.ne.s32.totalorder %s180, %s182
    %p186 = scmp.eq.s32.totalorder %s27, 0
    %p187 = por %p185, %p186
    %p188 = scmp.ne.s32.totalorder %s180, %s182
    %p189 = scmp.eq.s32.totalorder %s32, 1
    %p190 = por %p188, %p189
    %p191 = scmp.ne.s32.totalorder %s182, %s183
    %p192 = scmp.eq.s32.totalorder %s32, 0
    %p193 = por %p191, %p192
    %p194 = scmp.ne.s32.totalorder %s182, %s183
    %p195 = scmp.eq.s32.totalorder %s33, 1
    %p196 = por %p194, %p195
    %p198 = scmp.ne.s32.totalorder %s183, %s197
    %p199 = scmp.eq.s32.totalorder %s33, 0
    %p200 = por %p198, %p199
    %s202 = sadd.s32 %s201, 1
    %p205 = scmp.eq.s32.totalorder %s27, 1
    %p206 = scmp.ne.s32.totalorder %s201, %s203
    %p207 = scmp.eq.s32.totalorder %s27, 0
    %p208 = por %p206, %p207
    %p209 = scmp.ne.s32.totalorder %s201, %s203
    %p210 = scmp.eq.s32.totalorder %s32, 1
    %p211 = por %p209, %p210
    %p212 = scmp.ne.s32.totalorder %s203, %s204
    %p213 = scmp.eq.s32.totalorder %s32, 0
    %p214 = por %p212, %p213
    %p215 = scmp.ne.s32.totalorder %s203, %s204
    %p216 = scmp.eq.s32.totalorder %s33, 1
    %p217 = por %p215, %p216
    %p219 = scmp.ne.s32.totalorder %s204, %s218
    %p220 = scmp.eq.s32.totalorder %s33, 0
    %p221 = por %p219, %p220
    %s223 = sadd.s32 %s222, 1
    %p226 = scmp.eq.s32.totalorder %s27, 1
    %p227 = scmp.ne.s32.totalorder %s222, %s224
    %p228 = scmp.eq.s32.totalorder %s27, 0
    %p229 = por %p227, %p228
    %p230 = scmp.ne.s32.totalorder %s222, %s224
    %p231 = scmp.eq.s32.totalorder %s32, 1
    %p232 = por %p230, %p231
    %p233 = scmp.ne.s32.totalorder %s224, %s225
    %p234 = scmp.eq.s32.totalorder %s32, 0
    %p235 = por %p233, %p234
    %p236 = scmp.ne.s32.totalorder %s224, %s225
    %p237 = scmp.eq.s32.totalorder %s33, 1
    %p238 = por %p236, %p237
    %p240 = scmp.ne.s32.totalorder %s225, %s239
    %p241 = scmp.eq.s32.totalorder %s33, 0
    %p242 = por %p240, %p241
    %s243 = ssub.s32 %s34, %s46
    %p244 = scmp.eq.s32.totalorder %s243, 0
    %s246 = sadd.s32 %s245, 1
    %s247 = scalar_select %p244, %s245, %s246
    %p250 = pneg %p244
    %p251 = scmp.eq.s32.totalorder %s27, 1
    %p252 = por %p250, %p251
    %p253 = scmp.ne.s32.totalorder %s245, %s248
    %p254 = scmp.eq.s32.totalorder %s27, 0
    %p255 = por %p253, %p254
    %p256 = scmp.ne.s32.totalorder %s245, %s248
    %p257 = scmp.eq.s32.totalorder %s32, 1
    %p258 = por %p256, %p257
    %p259 = scmp.ne.s32.totalorder %s248, %s249
    %p260 = scmp.eq.s32.totalorder %s32, 0
    %p261 = por %p259, %p260
    %p262 = scmp.ne.s32.totalorder %s248, %s249
    %p263 = scmp.eq.s32.totalorder %s33, 1
    %p264 = por %p262, %p263
    %p266 = scmp.ne.s32.totalorder %s249, %s265
    %p267 = scmp.eq.s32.totalorder %s33, 0
    %p268 = por %p266, %p267
    %p269 = scmp.le.s32.totalorder 1, %s27
    %p270 = scmp.lt.s32.totalorder %s27, 3
    %p271 = pnand %p269, %p270
    %p272 = pneg %p271
    // Predicated region
    $region9: #{recgnn_forward.4} parent=5 // pred_check
      _
    $region10: #{recgnn_forward.4} parent=5 // pred_check_branch
      %274 = sbr.rel (%p271) target = $region12
    $region11: #{recgnn_forward.4} parent=5 // pred_region
      %s275 = ssub.s32 %s27, 1
      // Predicated region
      $region13: #{recgnn_forward.4} parent=11 // pred_check
        %p276 = pneg %p88
      $region14: #{recgnn_forward.4} parent=11 // pred_check_branch
        %278 = sbr.rel (%p276) target = $region16
      $region15: #{recgnn_forward.4} parent=11 // pred_region
        _
      $region16: #{recgnn_forward.4} parent=11 // pred_fallthru
        _
      // Predicated region
      $region17: #{recgnn_forward.4} parent=11 // pred_check
        %p279 = pneg %p109
      $region18: #{recgnn_forward.4} parent=11 // pred_check_branch
        %281 = sbr.rel (%p279) target = $region20
      $region19: #{recgnn_forward.4} parent=11 // pred_region
        _
      $region20: #{recgnn_forward.4} parent=11 // pred_fallthru
        _
      // Predicated region
      $region21: #{recgnn_forward.4} parent=11 // pred_check
        %p282 = pneg %p130
      $region22: #{recgnn_forward.4} parent=11 // pred_check_branch
        %284 = sbr.rel (%p282) target = $region24
      $region23: #{recgnn_forward.4} parent=11 // pred_region
        _
      $region24: #{recgnn_forward.4} parent=11 // pred_fallthru
        _
      // Predicated region
      $region25: #{recgnn_forward.4} parent=11 // pred_check
        %p285 = pneg %p151
      $region26: #{recgnn_forward.4} parent=11 // pred_check_branch
        %287 = sbr.rel (%p285) target = $region28
      $region27: #{recgnn_forward.4} parent=11 // pred_region
        _
      $region28: #{recgnn_forward.4} parent=11 // pred_fallthru
        _
      // Predicated region
      $region29: #{recgnn_forward.4} parent=11 // pred_check
        %p288 = pneg %p172
      $region30: #{recgnn_forward.4} parent=11 // pred_check_branch
        %290 = sbr.rel (%p288) target = $region32
      $region31: #{recgnn_forward.4} parent=11 // pred_region
        _
      $region32: #{recgnn_forward.4} parent=11 // pred_fallthru
        _
      // Predicated region
      $region33: #{recgnn_forward.4} parent=11 // pred_check
        %p291 = pneg %p193
      $region34: #{recgnn_forward.4} parent=11 // pred_check_branch
        %293 = sbr.rel (%p291) target = $region36
      $region35: #{recgnn_forward.4} parent=11 // pred_region
        _
      $region36: #{recgnn_forward.4} parent=11 // pred_fallthru
        _
      // Predicated region
      $region37: #{recgnn_forward.4} parent=11 // pred_check
        %p294 = pneg %p214
      $region38: #{recgnn_forward.4} parent=11 // pred_check_branch
        %296 = sbr.rel (%p294) target = $region40
      $region39: #{recgnn_forward.4} parent=11 // pred_region
        _
      $region40: #{recgnn_forward.4} parent=11 // pred_fallthru
        _
      // Predicated region
      $region41: #{recgnn_forward.4} parent=11 // pred_check
        %p297 = pneg %p235
      $region42: #{recgnn_forward.4} parent=11 // pred_check_branch
        %299 = sbr.rel (%p297) target = $region44
      $region43: #{recgnn_forward.4} parent=11 // pred_region
        _
      $region44: #{recgnn_forward.4} parent=11 // pred_fallthru
        _
    $region12: #{recgnn_forward.4} parent=5 // pred_fallthru
      _
    %p300 = scmp.lt.s32.totalorder %s27, 2
    // Predicated region
    $region45: #{recgnn_forward.4} parent=5 // pred_check
      %p301 = pneg %p300
    $region46: #{recgnn_forward.4} parent=5 // pred_check_branch
      %303 = sbr.rel (%p301) target = $region48
    $region47: #{recgnn_forward.4} parent=5 // pred_region
      // Predicated region
      $region49: #{recgnn_forward.4} parent=47 // pred_check
        %p304 = pneg %p61
      $region50: #{recgnn_forward.4} parent=47 // pred_check_branch
        %306 = sbr.rel (%p304) target = $region52
      $region51: #{recgnn_forward.4} parent=47 // pred_region
        %p307 = scmp.lt.s32.totalorder %s34, 1
        %s308 = scalar_select %p307, %s34, 1
        %p309 = scmp.lt.s32.totalorder %s35, 0
        %s310 = scalar_select %p309, %s35, 0
        %s311 = sadd.s32 %s310, %s308
        %s312 = scalar_lea.vmem %s2, %s311
      $region52: #{recgnn_forward.4} parent=47 // pred_fallthru
        _
    $region48: #{recgnn_forward.4} parent=5 // pred_fallthru
      _
    %p313 = scmp.le.s32.totalorder 1, %s27
    %p314 = scmp.lt.s32.totalorder %s27, 3
    %p315 = pnand %p313, %p314
    %p316 = pneg %p315
    // Predicated region
    $region53: #{recgnn_forward.4} parent=5 // pred_check
      _
    $region54: #{recgnn_forward.4} parent=5 // pred_check_branch
      %318 = sbr.rel (%p315) target = $region56
    $region55: #{recgnn_forward.4} parent=5 // pred_region
      %s319 = ssub.s32 %s27, 1
      %p320 = scmp.lt.s32.totalorder %s36, 1
      %s321 = scalar_select %p320, %s36, 1
      %p322 = scmp.lt.s32.totalorder %s37, 0
      %s323 = scalar_select %p322, %s37, 0
      %s324 = sadd.s32 %s323, %s321
      %s325 = scalar_lea.vmem %s2, %s324
      %p326 = pneg %p67
      %p327 = pneg %p64
      %p328 = pneg %p88
      %p329 = pneg %p85
      %p330 = pneg %p109
      %p331 = pneg %p106
      %p332 = pneg %p130
      %p333 = pneg %p127
      %p334 = pneg %p151
      %p335 = pneg %p148
      %p336 = pneg %p172
      %p337 = pneg %p169
      %p338 = pneg %p193
      %p339 = pneg %p190
      %p340 = pneg %p214
      %p341 = pneg %p211
      %p342 = pneg %p235
      %p343 = pneg %p232
      %p344 = pneg %p261
      %p345 = pneg %p258
      %p346 = scmp.lt.s32.totalorder %s36, 1
      %s347 = scalar_select %p346, %s36, 1
      %s348 = smul.addr %s347, 2
      %s349 = smul.addr %s348, 8
      %s350 = scalar_lea.vmem %s11, %s349
      %p351 = scmp.lt.s32.totalorder %s36, 1
      %s352 = scalar_select %p351, %s36, 1
      %p353 = scmp.lt.s32.totalorder %s37, 0
      %s354 = scalar_select %p353, %s37, 0
      %s355 = sadd.s32 %s354, %s352
      %s356 = scalar_lea.vmem %s2, %s355
      %p357 = scmp.lt.s32.totalorder %s36, 1
      %s358 = scalar_select %p357, %s36, 1
      %s359 = smul.addr %s358, 2
      %s360 = smul.addr %s359, 8
      %s361 = scalar_lea.vmem %s11, %s360
      %p363 = scmp.eq.s32.totalorder %s37, 0
      // Predicated region
      $region57: #{recgnn_forward.4} parent=55 // pred_check
        %p364 = pneg %p363
      $region58: #{recgnn_forward.4} parent=55 // pred_check_branch
        %366 = sbr.rel (%p364) target = $region60
      $region59: #{recgnn_forward.4} parent=55 // pred_region
        %367 = vst [vmem:[%s361] sm:$0xff] 0.0
        %368 = vst [vmem:[%s361 + $0x8] sm:$0xff] 0.0
      $region60: #{recgnn_forward.4} parent=55 // pred_fallthru
        _
      %s369 = sadd.s32 %s36, %s37
      %s370 = smul.u32 %s369, 16
      loop: start=0, step=1, limit=2
      $region61: #{recgnn_forward.4} parent=55 // loop_pre_header
        _
      $region62: #{recgnn_forward.4} parent=55 // loop_header
        %s372 = sphi 0, %s376
        %p373 = scmp.ge.s32.totalorder %s372, 2
      $region63: #{recgnn_forward.4} parent=55 // loop_header_branch
        %375 = sbr.rel (%p373) target = $region67
      $region64: #{recgnn_forward.4} parent=55 // loop_body
        %s377 = smul.u32 %s372, 8
        %s378 = sadd.s32 %s370, %s377
        %s379 = sld [smem:[#allocation5 + %s378]]
        %s380 = sld [smem:[#allocation6 + %s378]]
        %s381 = scalar_lea.vmem %s3, %s379
        %v382 = vld [vmem:[%s381] sm:$0x1]
        %s383 = scalar_lea.vmem %s3, %s380
        %v384 = vld [vmem:[%s383] sm:$0x1]
        %s385 = sadd.s32 %s378, 1
        %s386 = sld [smem:[#allocation5 + %s385]]
        %s387 = sld [smem:[#allocation6 + %s385]]
        %s388 = scalar_lea.vmem %s3, %s386
        %v389 = vld [vmem:[%s388] sm:$0x1]
        %s390 = scalar_lea.vmem %s3, %s387
        %v391 = vld [vmem:[%s390] sm:$0x1]
        %s392 = sadd.s32 %s378, 2
        %s393 = sld [smem:[#allocation5 + %s392]]
        %s394 = sld [smem:[#allocation6 + %s392]]
        %s395 = scalar_lea.vmem %s3, %s393
        %v396 = vld [vmem:[%s395] sm:$0x1]
        %s397 = scalar_lea.vmem %s3, %s394
        %v398 = vld [vmem:[%s397] sm:$0x1]
        %s399 = sadd.s32 %s378, 3
        %s400 = sld [smem:[#allocation5 + %s399]]
        %s401 = sld [smem:[#allocation6 + %s399]]
        %s402 = scalar_lea.vmem %s3, %s400
        %v403 = vld [vmem:[%s402] sm:$0x1]
        %s404 = scalar_lea.vmem %s3, %s401
        %v405 = vld [vmem:[%s404] sm:$0x1]
        %s406 = sadd.s32 %s378, 4
        %s407 = sld [smem:[#allocation5 + %s406]]
        %s408 = sld [smem:[#allocation6 + %s406]]
        %s409 = scalar_lea.vmem %s3, %s407
        %v410 = vld [vmem:[%s409] sm:$0x1]
        %s411 = scalar_lea.vmem %s3, %s408
        %v412 = vld [vmem:[%s411] sm:$0x1]
        %s413 = sadd.s32 %s378, 5
        %s414 = sld [smem:[#allocation5 + %s413]]
        %s415 = sld [smem:[#allocation6 + %s413]]
        %s416 = scalar_lea.vmem %s3, %s414
        %v417 = vld [vmem:[%s416] sm:$0x1]
        %s418 = scalar_lea.vmem %s3, %s415
        %v419 = vld [vmem:[%s418] sm:$0x1]
        %s420 = sadd.s32 %s378, 6
        %s421 = sld [smem:[#allocation5 + %s420]]
        %s422 = sld [smem:[#allocation6 + %s420]]
        %s423 = scalar_lea.vmem %s3, %s421
        %v424 = vld [vmem:[%s423] sm:$0x1]
        %s425 = scalar_lea.vmem %s3, %s422
        %v426 = vld [vmem:[%s425] sm:$0x1]
        %s427 = sadd.s32 %s378, 7
        %s428 = sld [smem:[#allocation5 + %s427]]
        %s429 = sld [smem:[#allocation6 + %s427]]
        %s430 = scalar_lea.vmem %s3, %s428
        %v431 = vld [vmem:[%s430] sm:$0x1]
        %s432 = scalar_lea.vmem %s3, %s429
        %v433 = vld [vmem:[%s432] sm:$0x1]
        %v435 = vrot.slane %v389, 7
        %v438 = vrot.slane %v396, 6
        %v441 = vrot.slane %v403, 5
        %v444 = vrot.slane %v410, 4
        %v447 = vrot.slane %v417, 3
        %v450 = vrot.slane %v424, 2
        %v453 = vrot.slane %v431, 1
        %vm455 = vcmask 1040384
        %v456 = vsel %vm455, %v382, %v435
        %vm457 = vcmask 1041408
        %v458 = vsel %vm457, %v456, %v438
        %vm459 = vcmask 1042432
        %v460 = vsel %vm459, %v458, %v441
        %vm461 = vcmask 1043456
        %v462 = vsel %vm461, %v460, %v444
        %vm463 = vcmask 1044480
        %v464 = vsel %vm463, %v462, %v447
        %vm465 = vcmask 1045504
        %v466 = vsel %vm465, %v464, %v450
        %vm467 = vcmask 1046528
        %v468 = vsel %vm467, %v466, %v453
        %s469 = scalar_lea.vmem [#allocation2], %s377
        %470 = vst [vmem:[%s469] sm:$0xff] %v468
        %v472 = vrot.slane %v391, 7
        %v475 = vrot.slane %v398, 6
        %v478 = vrot.slane %v405, 5
        %v481 = vrot.slane %v412, 4
        %v484 = vrot.slane %v419, 3
        %v487 = vrot.slane %v426, 2
        %v490 = vrot.slane %v433, 1
        %v492 = vsel %vm455, %v384, %v472
        %v493 = vsel %vm457, %v492, %v475
        %v494 = vsel %vm459, %v493, %v478
        %v495 = vsel %vm461, %v494, %v481
        %v496 = vsel %vm463, %v495, %v484
        %v497 = vsel %vm465, %v496, %v487
        %v498 = vsel %vm467, %v497, %v490
        %s499 = scalar_lea.vmem [#allocation3], %s377
        %500 = vst [vmem:[%s499] sm:$0xff] %v498
      $region65: #{recgnn_forward.4} parent=55 // loop_footer
        %s376 = sadd.s32 1, %s372
      $region66: #{recgnn_forward.4} parent=55 // loop_footer_branch
        %371 = sbr.rel target = $region62
      $region67: #{recgnn_forward.4} parent=55 // loop_exit
        _
      %v501 = vld [vmem:[#allocation2] sm:$0xff]
      %v502 = vld [vmem:[#allocation2 + $0x8] sm:$0xff]
      %v503 = vpack.c.bf16 %v502, %v501
      %v504 = vld [vmem:[#allocation3] sm:$0xff]
      %v505 = vld [vmem:[#allocation3 + $0x8] sm:$0xff]
      %v506 = vpack.c.bf16 %v505, %v504
      %v507 = vld [vmem:[%s4] sm:$0xf]
      %v508 = vld [vmem:[%s4 + $0x4] sm:$0xf]
      %v509 = vld [vmem:[%s4 + $0x8] sm:$0xf]
      %v510 = vld [vmem:[%s4 + $0xc] sm:$0xf]
      %v511 = vld [vmem:[%s4 + $0x10] sm:$0xf]
      %v512 = vld [vmem:[%s4 + $0x14] sm:$0xf]
      %v513 = vld [vmem:[%s4 + $0x18] sm:$0xf]
      %v514 = vld [vmem:[%s4 + $0x1c] sm:$0xf]
      %v515 = vld [vmem:[%s4 + $0x20] sm:$0xf]
      %v516 = vld [vmem:[%s4 + $0x24] sm:$0xf]
      %v517 = vld [vmem:[%s4 + $0x28] sm:$0xf]
      %v518 = vld [vmem:[%s4 + $0x2c] sm:$0xf]
      %v519 = vld [vmem:[%s4 + $0x30] sm:$0xf]
      %v520 = vld [vmem:[%s4 + $0x34] sm:$0xf]
      %v521 = vld [vmem:[%s4 + $0x38] sm:$0xf]
      %v522 = vld [vmem:[%s4 + $0x3c] sm:$0xf]
      %v523 = vld [vmem:[%s5] sm:$0xf]
      %v524 = vld [vmem:[%s5 + $0x4] sm:$0xf]
      %v525 = vld [vmem:[%s5 + $0x8] sm:$0xf]
      %v526 = vld [vmem:[%s5 + $0xc] sm:$0xf]
      %v527 = vld [vmem:[%s5 + $0x10] sm:$0xf]
      %v528 = vld [vmem:[%s5 + $0x14] sm:$0xf]
      %v529 = vld [vmem:[%s5 + $0x18] sm:$0xf]
      %v530 = vld [vmem:[%s5 + $0x1c] sm:$0xf]
      %v531 = vld [vmem:[%s5 + $0x20] sm:$0xf]
      %v532 = vld [vmem:[%s5 + $0x24] sm:$0xf]
      %v533 = vld [vmem:[%s5 + $0x28] sm:$0xf]
      %v534 = vld [vmem:[%s5 + $0x2c] sm:$0xf]
      %v535 = vld [vmem:[%s5 + $0x30] sm:$0xf]
      %v536 = vld [vmem:[%s5 + $0x34] sm:$0xf]
      %v537 = vld [vmem:[%s5 + $0x38] sm:$0xf]
      %v538 = vld [vmem:[%s5 + $0x3c] sm:$0xf]
      %v555 = vunpack.c.l.b16 %v523
      %v556 = vunpack.c.l.b16 %v524
      %v557 = vunpack.c.l.b16 %v525
      %v558 = vunpack.c.l.b16 %v526
      %v559 = vunpack.c.l.b16 %v527
      %v560 = vunpack.c.l.b16 %v528
      %v561 = vunpack.c.l.b16 %v529
      %v562 = vunpack.c.l.b16 %v530
      %v563 = vunpack.c.l.b16 %v531
      %v564 = vunpack.c.l.b16 %v532
      %v565 = vunpack.c.l.b16 %v533
      %v566 = vunpack.c.l.b16 %v534
      %v567 = vunpack.c.l.b16 %v535
      %v568 = vunpack.c.l.b16 %v536
      %v569 = vunpack.c.l.b16 %v537
      %v570 = vunpack.c.l.b16 %v538
      %v571 = vpack.c.b16 %v556, %v555
      %v572 = vpack.c.b16 %v558, %v557
      %v573 = vpack.c.b16 %v560, %v559
      %v574 = vpack.c.b16 %v562, %v561
      %v575 = vpack.c.b16 %v564, %v563
      %v576 = vpack.c.b16 %v566, %v565
      %v577 = vpack.c.b16 %v568, %v567
      %v578 = vpack.c.b16 %v570, %v569
      %587 = vmatprep.subr.bf16.mxu0 0
      %588 = vmatpush1.bf16.msra.mxu0 %v571
      %589 = vmatprep.subr.bf16.mxu0 0
      %590 = vmatpush1.bf16.msra.mxu0 %v572
      %591 = vmatprep.subr.bf16.mxu0 0
      %592 = vmatpush1.bf16.msra.mxu0 %v573
      %593 = vmatprep.subr.bf16.mxu0 0
      %594 = vmatpush1.bf16.msra.mxu0 %v574
      %595 = vmatprep.subr.bf16.mxu0 0
      %596 = vmatpush1.bf16.msra.mxu0 %v575
      %597 = vmatprep.subr.bf16.mxu0 0
      %598 = vmatpush1.bf16.msra.mxu0 %v576
      %599 = vmatprep.subr.bf16.mxu0 0
      %600 = vmatpush1.bf16.msra.mxu0 %v577
      %601 = vmatprep.subr.bf16.mxu0 0
      %602 = vmatpush1.bf16.msra.mxu0 %v578
      %603 = vmatprep.subr.bf16.mxu0 0
      %604 = vmatpush1.bf16.msra.mxu0 0
      %605 = vmatprep.subr.bf16.mxu0 0
      %606 = vmatpush1.bf16.msra.mxu0 0
      %607 = vmatprep.subr.bf16.mxu0 0
      %608 = vmatpush1.bf16.msra.mxu0 0
      %609 = vmatprep.subr.bf16.mxu0 0
      %610 = vmatpush1.bf16.msra.mxu0 0
      %611 = vmatprep.subr.bf16.mxu0 0
      %612 = vmatpush1.bf16.msra.mxu0 0
      %613 = vmatprep.subr.bf16.mxu0 0
      %614 = vmatpush1.bf16.msra.mxu0 0
      %615 = vmatprep.subr.bf16.mxu0 0
      %616 = vmatpush1.bf16.msra.mxu0 0
      %617 = vmatprep.subr.bf16.mxu0 0
      %618 = vmatpush1.bf16.msra.mxu0 0
      %619 = vmatprep.mubr.bf16.mxu0 0
      %620 = vmatmul.mubr.bf16.gmra.mrb[0].mxu0 %v506
      %v621 = vpop.f32.mrb[0].mxu0
      %v622 = vadd.f32 0.0, %v621
      %v623 = vpop.f32.mrb[0].mxu0
      %v624 = vpop.f32.mrb[0].mxu0
      %v625 = vadd.f32 0.0, %v624
      %v626 = vpop.f32.mrb[0].mxu0
      %627 = vdwg.mxu0
      %v644 = vunpack.c.l.b16 %v507
      %v645 = vunpack.c.l.b16 %v508
      %v646 = vunpack.c.l.b16 %v509
      %v647 = vunpack.c.l.b16 %v510
      %v648 = vunpack.c.l.b16 %v511
      %v649 = vunpack.c.l.b16 %v512
      %v650 = vunpack.c.l.b16 %v513
      %v651 = vunpack.c.l.b16 %v514
      %v652 = vunpack.c.l.b16 %v515
      %v653 = vunpack.c.l.b16 %v516
      %v654 = vunpack.c.l.b16 %v517
      %v655 = vunpack.c.l.b16 %v518
      %v656 = vunpack.c.l.b16 %v519
      %v657 = vunpack.c.l.b16 %v520
      %v658 = vunpack.c.l.b16 %v521
      %v659 = vunpack.c.l.b16 %v522
      %v660 = vpack.c.b16 %v645, %v644
      %v661 = vpack.c.b16 %v647, %v646
      %v662 = vpack.c.b16 %v649, %v648
      %v663 = vpack.c.b16 %v651, %v650
      %v664 = vpack.c.b16 %v653, %v652
      %v665 = vpack.c.b16 %v655, %v654
      %v666 = vpack.c.b16 %v657, %v656
      %v667 = vpack.c.b16 %v659, %v658
      %676 = vmatprep.subr.bf16.mxu0 0
      %677 = vmatpush1.bf16.msra.mxu0 %v660
      %678 = vmatprep.subr.bf16.mxu0 0
      %679 = vmatpush1.bf16.msra.mxu0 %v661
      %680 = vmatprep.subr.bf16.mxu0 0
      %681 = vmatpush1.bf16.msra.mxu0 %v662
      %682 = vmatprep.subr.bf16.mxu0 0
      %683 = vmatpush1.bf16.msra.mxu0 %v663
      %684 = vmatprep.subr.bf16.mxu0 0
      %685 = vmatpush1.bf16.msra.mxu0 %v664
      %686 = vmatprep.subr.bf16.mxu0 0
      %687 = vmatpush1.bf16.msra.mxu0 %v665
      %688 = vmatprep.subr.bf16.mxu0 0
      %689 = vmatpush1.bf16.msra.mxu0 %v666
      %690 = vmatprep.subr.bf16.mxu0 0
      %691 = vmatpush1.bf16.msra.mxu0 %v667
      %692 = vmatprep.subr.bf16.mxu0 0
      %693 = vmatpush1.bf16.msra.mxu0 0
      %694 = vmatprep.subr.bf16.mxu0 0
      %695 = vmatpush1.bf16.msra.mxu0 0
      %696 = vmatprep.subr.bf16.mxu0 0
      %697 = vmatpush1.bf16.msra.mxu0 0
      %698 = vmatprep.subr.bf16.mxu0 0
      %699 = vmatpush1.bf16.msra.mxu0 0
      %700 = vmatprep.subr.bf16.mxu0 0
      %701 = vmatpush1.bf16.msra.mxu0 0
      %702 = vmatprep.subr.bf16.mxu0 0
      %703 = vmatpush1.bf16.msra.mxu0 0
      %704 = vmatprep.subr.bf16.mxu0 0
      %705 = vmatpush1.bf16.msra.mxu0 0
      %706 = vmatprep.subr.bf16.mxu0 0
      %707 = vmatpush1.bf16.msra.mxu0 0
      %708 = vmatprep.mubr.bf16.mxu0 0
      %709 = vmatmul.mubr.bf16.gmra.mrb[0].mxu0 %v503
      %v710 = vpop.f32.mrb[0].mxu0
      %v711 = vadd.f32 %v622, %v710
      %v712 = vpop.f32.mrb[0].mxu0
      %v713 = vpop.f32.mrb[0].mxu0
      %v714 = vadd.f32 %v625, %v713
      %v715 = vpop.f32.mrb[0].mxu0
      %716 = vdwg.mxu0
      %v717 = vld [vmem:[%s6] sm:$0x1]
      %v719 = vlaneseq
      %v720 = vshrl.u32 %v719, 7
      %v721 = vsub.s32 0, %v720
      %v722 = vrot.slane %v717, %v721
      %v724 = vadd.f32 %v711, %v722
      %v725 = vadd.f32 %v714, %v722
      %v726 = vmax.f32 %v724, 0.0
      %v727 = vmax.f32 %v725, 0.0
      %v728 = vpack.c.bf16 %v727, %v726
      %v729 = vld [vmem:[%s7] sm:$0xf]
      %v730 = vld [vmem:[%s7 + $0x4] sm:$0xf]
      %v731 = vld [vmem:[%s7 + $0x8] sm:$0xf]
      %v732 = vld [vmem:[%s7 + $0xc] sm:$0xf]
      %v733 = vld [vmem:[%s7 + $0x10] sm:$0xf]
      %v734 = vld [vmem:[%s7 + $0x14] sm:$0xf]
      %v735 = vld [vmem:[%s7 + $0x18] sm:$0xf]
      %v736 = vld [vmem:[%s7 + $0x1c] sm:$0xf]
      %v737 = vld [vmem:[%s7 + $0x20] sm:$0xf]
      %v738 = vld [vmem:[%s7 + $0x24] sm:$0xf]
      %v739 = vld [vmem:[%s7 + $0x28] sm:$0xf]
      %v740 = vld [vmem:[%s7 + $0x2c] sm:$0xf]
      %v741 = vld [vmem:[%s7 + $0x30] sm:$0xf]
      %v742 = vld [vmem:[%s7 + $0x34] sm:$0xf]
      %v743 = vld [vmem:[%s7 + $0x38] sm:$0xf]
      %v744 = vld [vmem:[%s7 + $0x3c] sm:$0xf]
      %v745 = vld [vmem:[%s8] sm:$0x1]
      %v747 = vlaneseq
      %v748 = vshrl.u32 %v747, 7
      %v749 = vsub.s32 0, %v748
      %v750 = vrot.slane %v745, %v749
      %v768 = vunpack.c.l.b16 %v729
      %v769 = vunpack.c.l.b16 %v730
      %v770 = vunpack.c.l.b16 %v731
      %v771 = vunpack.c.l.b16 %v732
      %v772 = vunpack.c.l.b16 %v733
      %v773 = vunpack.c.l.b16 %v734
      %v774 = vunpack.c.l.b16 %v735
      %v775 = vunpack.c.l.b16 %v736
      %v776 = vunpack.c.l.b16 %v737
      %v777 = vunpack.c.l.b16 %v738
      %v778 = vunpack.c.l.b16 %v739
      %v779 = vunpack.c.l.b16 %v740
      %v780 = vunpack.c.l.b16 %v741
      %v781 = vunpack.c.l.b16 %v742
      %v782 = vunpack.c.l.b16 %v743
      %v783 = vunpack.c.l.b16 %v744
      %v784 = vpack.c.b16 %v769, %v768
      %v785 = vpack.c.b16 %v771, %v770
      %v786 = vpack.c.b16 %v773, %v772
      %v787 = vpack.c.b16 %v775, %v774
      %v788 = vpack.c.b16 %v777, %v776
      %v789 = vpack.c.b16 %v779, %v778
      %v790 = vpack.c.b16 %v781, %v780
      %v791 = vpack.c.b16 %v783, %v782
      %800 = vmatprep.subr.bf16.mxu0 0
      %801 = vmatpush1.bf16.msra.mxu0 %v784
      %802 = vmatprep.subr.bf16.mxu0 0
      %803 = vmatpush1.bf16.msra.mxu0 %v785
      %804 = vmatprep.subr.bf16.mxu0 0
      %805 = vmatpush1.bf16.msra.mxu0 %v786
      %806 = vmatprep.subr.bf16.mxu0 0
      %807 = vmatpush1.bf16.msra.mxu0 %v787
      %808 = vmatprep.subr.bf16.mxu0 0
      %809 = vmatpush1.bf16.msra.mxu0 %v788
      %810 = vmatprep.subr.bf16.mxu0 0
      %811 = vmatpush1.bf16.msra.mxu0 %v789
      %812 = vmatprep.subr.bf16.mxu0 0
      %813 = vmatpush1.bf16.msra.mxu0 %v790
      %814 = vmatprep.subr.bf16.mxu0 0
      %815 = vmatpush1.bf16.msra.mxu0 %v791
      %816 = vmatprep.subr.bf16.mxu0 0
      %817 = vmatpush1.bf16.msra.mxu0 0
      %818 = vmatprep.subr.bf16.mxu0 0
      %819 = vmatpush1.bf16.msra.mxu0 0
      %820 = vmatprep.subr.bf16.mxu0 0
      %821 = vmatpush1.bf16.msra.mxu0 0
      %822 = vmatprep.subr.bf16.mxu0 0
      %823 = vmatpush1.bf16.msra.mxu0 0
      %824 = vmatprep.subr.bf16.mxu0 0
      %825 = vmatpush1.bf16.msra.mxu0 0
      %826 = vmatprep.subr.bf16.mxu0 0
      %827 = vmatpush1.bf16.msra.mxu0 0
      %828 = vmatprep.subr.bf16.mxu0 0
      %829 = vmatpush1.bf16.msra.mxu0 0
      %830 = vmatprep.subr.bf16.mxu0 0
      %831 = vmatpush1.bf16.msra.mxu0 0
      %832 = vmatprep.mubr.bf16.mxu0 0
      %833 = vmatmul.mubr.bf16.gmra.mrb[0].mxu0 %v728
      %v834 = vpop.f32.mrb[0].mxu0
      %v835 = vadd.f32 %v750, %v834
      %v836 = vpop.f32.mrb[0].mxu0
      %v837 = vpop.f32.mrb[0].mxu0
      %v838 = vadd.f32 %v750, %v837
      %v839 = vpop.f32.mrb[0].mxu0
      %840 = vdwg.mxu0
      %v841 = vmax.f32 %v835, 0.0
      %v842 = vmax.f32 %v838, 0.0
      %v843 = vpack.c.bf16 %v842, %v841
      %v844 = vld [vmem:[%s9] sm:$0xf]
      %v845 = vld [vmem:[%s9 + $0x4] sm:$0xf]
      %v846 = vld [vmem:[%s9 + $0x8] sm:$0xf]
      %v847 = vld [vmem:[%s9 + $0xc] sm:$0xf]
      %v848 = vld [vmem:[%s9 + $0x10] sm:$0xf]
      %v849 = vld [vmem:[%s9 + $0x14] sm:$0xf]
      %v850 = vld [vmem:[%s9 + $0x18] sm:$0xf]
      %v851 = vld [vmem:[%s9 + $0x1c] sm:$0xf]
      %v852 = vld [vmem:[%s9 + $0x20] sm:$0xf]
      %v853 = vld [vmem:[%s9 + $0x24] sm:$0xf]
      %v854 = vld [vmem:[%s9 + $0x28] sm:$0xf]
      %v855 = vld [vmem:[%s9 + $0x2c] sm:$0xf]
      %v856 = vld [vmem:[%s9 + $0x30] sm:$0xf]
      %v857 = vld [vmem:[%s9 + $0x34] sm:$0xf]
      %v858 = vld [vmem:[%s9 + $0x38] sm:$0xf]
      %v859 = vld [vmem:[%s9 + $0x3c] sm:$0xf]
      %v860 = vld [vmem:[%s10] sm:$0x1]
      %v862 = vlaneseq
      %v863 = vshrl.u32 %v862, 7
      %v864 = vsub.s32 0, %v863
      %v865 = vrot.slane %v860, %v864
      %v883 = vunpack.c.l.b16 %v844
      %v884 = vunpack.c.l.b16 %v845
      %v885 = vunpack.c.l.b16 %v846
      %v886 = vunpack.c.l.b16 %v847
      %v887 = vunpack.c.l.b16 %v848
      %v888 = vunpack.c.l.b16 %v849
      %v889 = vunpack.c.l.b16 %v850
      %v890 = vunpack.c.l.b16 %v851
      %v891 = vunpack.c.l.b16 %v852
      %v892 = vunpack.c.l.b16 %v853
      %v893 = vunpack.c.l.b16 %v854
      %v894 = vunpack.c.l.b16 %v855
      %v895 = vunpack.c.l.b16 %v856
      %v896 = vunpack.c.l.b16 %v857
      %v897 = vunpack.c.l.b16 %v858
      %v898 = vunpack.c.l.b16 %v859
      %v899 = vpack.c.b16 %v884, %v883
      %v900 = vpack.c.b16 %v886, %v885
      %v901 = vpack.c.b16 %v888, %v887
      %v902 = vpack.c.b16 %v890, %v889
      %v903 = vpack.c.b16 %v892, %v891
      %v904 = vpack.c.b16 %v894, %v893
      %v905 = vpack.c.b16 %v896, %v895
      %v906 = vpack.c.b16 %v898, %v897
      %915 = vmatprep.subr.bf16.mxu0 0
      %916 = vmatpush1.bf16.msra.mxu0 %v899
      %917 = vmatprep.subr.bf16.mxu0 0
      %918 = vmatpush1.bf16.msra.mxu0 %v900
      %919 = vmatprep.subr.bf16.mxu0 0
      %920 = vmatpush1.bf16.msra.mxu0 %v901
      %921 = vmatprep.subr.bf16.mxu0 0
      %922 = vmatpush1.bf16.msra.mxu0 %v902
      %923 = vmatprep.subr.bf16.mxu0 0
      %924 = vmatpush1.bf16.msra.mxu0 %v903
      %925 = vmatprep.subr.bf16.mxu0 0
      %926 = vmatpush1.bf16.msra.mxu0 %v904
      %927 = vmatprep.subr.bf16.mxu0 0
      %928 = vmatpush1.bf16.msra.mxu0 %v905
      %929 = vmatprep.subr.bf16.mxu0 0
      %930 = vmatpush1.bf16.msra.mxu0 %v906
      %931 = vmatprep.subr.bf16.mxu0 0
      %932 = vmatpush1.bf16.msra.mxu0 0
      %933 = vmatprep.subr.bf16.mxu0 0
      %934 = vmatpush1.bf16.msra.mxu0 0
      %935 = vmatprep.subr.bf16.mxu0 0
      %936 = vmatpush1.bf16.msra.mxu0 0
      %937 = vmatprep.subr.bf16.mxu0 0
      %938 = vmatpush1.bf16.msra.mxu0 0
      %939 = vmatprep.subr.bf16.mxu0 0
      %940 = vmatpush1.bf16.msra.mxu0 0
      %941 = vmatprep.subr.bf16.mxu0 0
      %942 = vmatpush1.bf16.msra.mxu0 0
      %943 = vmatprep.subr.bf16.mxu0 0
      %944 = vmatpush1.bf16.msra.mxu0 0
      %945 = vmatprep.subr.bf16.mxu0 0
      %946 = vmatpush1.bf16.msra.mxu0 0
      %947 = vmatprep.mubr.bf16.mxu0 0
      %948 = vmatmul.mubr.bf16.gmra.mrb[0].mxu0 %v843
      %v949 = vpop.f32.mrb[0].mxu0
      %v950 = vadd.f32 %v865, %v949
      %v951 = vpop.f32.mrb[0].mxu0
      %v952 = vpop.f32.mrb[0].mxu0
      %v953 = vadd.f32 %v865, %v952
      %v954 = vpop.f32.mrb[0].mxu0
      %955 = vdwg.mxu0
      %v956 = vmax.f32 %v950, 0.0
      %v957 = vmax.f32 %v953, 0.0
      %s958 = smul.u32 %s36, 16
      %s959 = ssub.s32 32, %s958
      %p960 = scmp.gt.s32.totalorder %s959, 0
      %s961 = scalar_select %p960, %s959, 0
      %p962 = scmp.lt.s32.totalorder %s961, 16
      %s963 = scalar_select %p962, %s961, 16
      %s964 = smul.u32 %s37, 16
      %v965 = vlaneseq
      %v966 = vshrl.u32 %v965, 7
      %v967 = vadd.s32 %v966, 8
      %v968 = vstv %s964
      %v969 = vadd.s32 %v968, %v966
      %v970 = vadd.s32 %v968, %v967
      %v971 = vstv %s963
      %vm972 = vcmp.lt.s32.totalorder %v969, %v971
      %vm973 = vcmp.lt.s32.totalorder %v970, %v971
      %v974 = vsel %vm972, %v956, 0.0
      %v975 = vsel %vm973, %v957, 0.0
      %v976 = vld [vmem:[%s356] sm:$0x1]
      %v977 = vlaneseq
      %v978 = vshrl.u32 %v977, 7
      %v979 = vsub.s32 0, %v978
      %v980 = vrot.slane %v976, %v979
      %vm981 = vcmp.eq.s32.totalorder %v966, %v980
      %vm982 = vcmp.eq.s32.totalorder %v967, %v980
      %v983 = vsel %vm981, 1, 0
      %v984 = vsel %vm982, 1, 0
      %v985 = vcvt.s32.f32 %v983
      %v986 = vcvt.s32.f32 %v984
      %v987 = vpack.c.bf16 %v986, %v985
      %v988 = vld [vmem:[%s361] sm:$0xff]
      %v989 = vld [vmem:[%s361 + $0x8] sm:$0xff]
      %v990 = vpack.c.bf16 %v975, %v974
      %vm991 = vcmask 130048
      %v993 = vsel %vm991, %v987, 0
      %995 = vmatprep.subr.bf16.mxu0 0
      %996 = vmatpush1.bf16.msra.mxu0 %v990
      %997 = vmatprep.subr.bf16.mxu0 0
      %998 = vmatpush1.bf16.msra.mxu0 0
      %999 = vmatprep.subr.bf16.mxu0 0
      %1000 = vmatpush1.bf16.msra.mxu0 0
      %1001 = vmatprep.subr.bf16.mxu0 0
      %1002 = vmatpush1.bf16.msra.mxu0 0
      %1003 = vmatprep.subr.bf16.mxu0 0
      %1004 = vmatpush1.bf16.msra.mxu0 0
      %1005 = vmatprep.subr.bf16.mxu0 0
      %1006 = vmatpush1.bf16.msra.mxu0 0
      %1007 = vmatprep.subr.bf16.mxu0 0
      %1008 = vmatpush1.bf16.msra.mxu0 0
      %1009 = vmatprep.subr.bf16.mxu0 0
      %1010 = vmatpush1.bf16.msra.mxu0 0
      %1011 = vmatprep.subr.bf16.mxu0 0
      %1012 = vmatpush1.bf16.msra.mxu0 0
      %1013 = vmatprep.subr.bf16.mxu0 0
      %1014 = vmatpush1.bf16.msra.mxu0 0
      %1015 = vmatprep.subr.bf16.mxu0 0
      %1016 = vmatpush1.bf16.msra.mxu0 0
      %1017 = vmatprep.subr.bf16.mxu0 0
      %1018 = vmatpush1.bf16.msra.mxu0 0
      %1019 = vmatprep.subr.bf16.mxu0 0
      %1020 = vmatpush1.bf16.msra.mxu0 0
      %1021 = vmatprep.subr.bf16.mxu0 0
      %1022 = vmatpush1.bf16.msra.mxu0 0
      %1023 = vmatprep.subr.bf16.mxu0 0
      %1024 = vmatpush1.bf16.msra.mxu0 0
      %1025 = vmatprep.subr.bf16.mxu0 0
      %1026 = vmatpush1.bf16.msra.mxu0 0
      %1027 = vmatprep.mubr.bf16.mxu0 0
      %1028 = vmatmul.mubr.bf16.gmra.mrb[0].mxu0 %v993
      %v1029 = vpop.f32.mrb[0].mxu0
      %v1030 = vadd.f32 0.0, %v1029
      %v1031 = vpop.f32.mrb[0].mxu0
      %v1032 = vpop.f32.mrb[0].mxu0
      %v1033 = vadd.f32 0.0, %v1032
      %v1034 = vpop.f32.mrb[0].mxu0
      %1035 = vdwg.mxu0
      %v1036 = vadd.f32 %v988, %v1030
      %v1037 = vadd.f32 %v989, %v1033
      %1038 = vst [vmem:[%s361] sm:$0xff] %v1036
      %1039 = vst [vmem:[%s361 + $0x8] sm:$0xff] %v1037
      %p1040 = scmp.lt.s32.totalorder %s36, 1
      %s1041 = scalar_select %p1040, %s36, 1
      %s1042 = smul.addr %s1041, 2
      %s1043 = smul.addr %s1042, 8
      %s1044 = scalar_lea.vmem %s11, %s1043
      // Predicated region
      $region68: #{recgnn_forward.4} parent=55 // pred_check
        %p1045 = pneg %p258
      $region69: #{recgnn_forward.4} parent=55 // pred_check_branch
        %1047 = sbr.rel (%p1045) target = $region71
      $region70: #{recgnn_forward.4} parent=55 // pred_region
        _
      $region71: #{recgnn_forward.4} parent=55 // pred_fallthru
        _
    $region56: #{recgnn_forward.4} parent=5 // pred_fallthru
      _
    %p1048 = scmp.le.s32.totalorder 2, %s27
    // Predicated region
    $region72: #{recgnn_forward.4} parent=5 // pred_check
      %p1049 = pneg %p1048
    $region73: #{recgnn_forward.4} parent=5 // pred_check_branch
      %1051 = sbr.rel (%p1049) target = $region75
    $region74: #{recgnn_forward.4} parent=5 // pred_region
      %s1052 = ssub.s32 %s27, 2
      // Predicated region
      $region76: #{recgnn_forward.4} parent=74 // pred_check
        %p1053 = pneg %p264
      $region77: #{recgnn_forward.4} parent=74 // pred_check_branch
        %1055 = sbr.rel (%p1053) target = $region79
      $region78: #{recgnn_forward.4} parent=74 // pred_region
        %p1056 = scmp.lt.s32.totalorder %s38, 1
        %s1057 = scalar_select %p1056, %s38, 1
        %s1058 = smul.addr %s1057, 2
        %s1059 = smul.addr %s1058, 8
        %s1060 = scalar_lea.vmem %s11, %s1059
      $region79: #{recgnn_forward.4} parent=74 // pred_fallthru
        _
    $region75: #{recgnn_forward.4} parent=5 // pred_fallthru
      _
  $region6: #{recgnn_forward.4} parent=0 // loop_footer
    %s31 = sadd.s32 1, %s27
  $region7: #{recgnn_forward.4} parent=0 // loop_footer_branch
    %26 = sbr.rel target = $region3
  $region8: #{recgnn_forward.4} parent=0 // loop_exit
    _

// kernel: recgnn_forward.5
$region0: #{recgnn_forward.5}
  #allocation0 [shape = 'u32[]', space=smem, size = 0x4, offset = 0x4, fixed_abs, tag = 'smem constant byte address 0x4 - core index']
  #allocation1 [shape = 'u32[144,128]{1,0:T(1,128)}', space=vmem, size = 0x12000, scoped, tag = 'internal scratch']
  #allocation2 [shape = 'f32[1,1]{1,0:T(1,128)S(6)}', space=smem, size = 0x200, scoped, tag = 'scoped memory for recgnn_forward.5']
  %s0 = inlined_call_operand.<no memory space> [shape: f32[1,1], index: 0, kind: input, shape index: {}]
  %s1 = inlined_call_operand.vmem [shape: f32[16,128], index: 1, kind: input, shape index: {}]
  %s2 = inlined_call_operand.vmem [shape: f32[2,16,128], index: 2, kind: input, shape index: {}]
  %s3 = inlined_call_operand.vmem [shape: bf16[128,128], index: 3, kind: input, shape index: {}]
  %s4 = inlined_call_operand.vmem [shape: f32[1,128], index: 4, kind: input, shape index: {}]
  %s5 = inlined_call_operand.vmem [shape: bf16[128,128], index: 5, kind: input, shape index: {}]
  %s6 = inlined_call_operand.vmem [shape: f32[1,128], index: 6, kind: input, shape index: {}]
  %s7 = inlined_call_operand.vmem [shape: bf16[128,128], index: 7, kind: input, shape index: {}]
  %s8 = inlined_call_operand.vmem [shape: f32[1,128], index: 8, kind: input, shape index: {}]
  %s9 = inlined_call_operand.vmem [shape: bf16[128,128], index: 9, kind: input, shape index: {}]
  %s10 = inlined_call_operand.vmem [shape: f32[1,128], index: 10, kind: input, shape index: {}]
  %s11 = inlined_call_operand.vmem [shape: bf16[128,128], index: 11, kind: input, shape index: {}]
  %s12 = inlined_call_operand.vmem [shape: f32[1,128], index: 12, kind: input, shape index: {}]
  %s13 = inlined_call_operand.vmem [shape: bf16[128,128], index: 13, kind: input, shape index: {}]
  %s14 = inlined_call_operand.vmem [shape: f32[1,128], index: 14, kind: input, shape index: {}]
  %s15 = inlined_call_operand.vmem [shape: f32[16,128], index: 15, kind: output, shape index: {}]
  %s16 = sld [smem:[#allocation0]]
  $region70: #{recgnn_forward.5} parent=0
    _
  %s18 = ssub.s32 1, %s16
  %s19 = scalar_select 0, %s18, %s16
  %20 = sst [smem:[#allocation2]] %s0
  // Predicated region
  $region2: #{recgnn_forward.5} parent=0 // pred_check
    _
  $region3: #{recgnn_forward.5} parent=0 // pred_check_branch
    %22 = sbr.rel (0) target = $region5
  $region4: #{recgnn_forward.5} parent=0 // pred_region
    _
  $region5: #{recgnn_forward.5} parent=0 // pred_fallthru
    _
  // Predicated region
  $region6: #{recgnn_forward.5} parent=0 // pred_check
    _
  $region7: #{recgnn_forward.5} parent=0 // pred_check_branch
    %24 = sbr.rel (0) target = $region9
  $region8: #{recgnn_forward.5} parent=0 // pred_region
    _
  $region9: #{recgnn_forward.5} parent=0 // pred_fallthru
    _
  // Predicated region
  $region10: #{recgnn_forward.5} parent=0 // pred_check
    _
  $region11: #{recgnn_forward.5} parent=0 // pred_check_branch
    %26 = sbr.rel (0) target = $region13
  $region12: #{recgnn_forward.5} parent=0 // pred_region
    _
  $region13: #{recgnn_forward.5} parent=0 // pred_fallthru
    _
  // Predicated region
  $region14: #{recgnn_forward.5} parent=0 // pred_check
    _
  $region15: #{recgnn_forward.5} parent=0 // pred_check_branch
    %28 = sbr.rel (0) target = $region17
  $region16: #{recgnn_forward.5} parent=0 // pred_region
    _
  $region17: #{recgnn_forward.5} parent=0 // pred_fallthru
    _
  // Predicated region
  $region18: #{recgnn_forward.5} parent=0 // pred_check
    _
  $region19: #{recgnn_forward.5} parent=0 // pred_check_branch
    %30 = sbr.rel (0) target = $region21
  $region20: #{recgnn_forward.5} parent=0 // pred_region
    _
  $region21: #{recgnn_forward.5} parent=0 // pred_fallthru
    _
  // Predicated region
  $region22: #{recgnn_forward.5} parent=0 // pred_check
    _
  $region23: #{recgnn_forward.5} parent=0 // pred_check_branch
    %32 = sbr.rel (0) target = $region25
  $region24: #{recgnn_forward.5} parent=0 // pred_region
    _
  $region25: #{recgnn_forward.5} parent=0 // pred_fallthru
    _
  // Predicated region
  $region26: #{recgnn_forward.5} parent=0 // pred_check
    _
  $region27: #{recgnn_forward.5} parent=0 // pred_check_branch
    %34 = sbr.rel (0) target = $region29
  $region28: #{recgnn_forward.5} parent=0 // pred_region
    _
  $region29: #{recgnn_forward.5} parent=0 // pred_fallthru
    _
  // Predicated region
  $region30: #{recgnn_forward.5} parent=0 // pred_check
    _
  $region31: #{recgnn_forward.5} parent=0 // pred_check_branch
    %36 = sbr.rel (0) target = $region33
  $region32: #{recgnn_forward.5} parent=0 // pred_region
    _
  $region33: #{recgnn_forward.5} parent=0 // pred_fallthru
    _
  // Predicated region
  $region34: #{recgnn_forward.5} parent=0 // pred_check
    _
  $region35: #{recgnn_forward.5} parent=0 // pred_check_branch
    %38 = sbr.rel (0) target = $region37
  $region36: #{recgnn_forward.5} parent=0 // pred_region
    _
  $region37: #{recgnn_forward.5} parent=0 // pred_fallthru
    _
  // Predicated region
  $region38: #{recgnn_forward.5} parent=0 // pred_check
    _
  $region39: #{recgnn_forward.5} parent=0 // pred_check_branch
    %40 = sbr.rel (0) target = $region41
  $region40: #{recgnn_forward.5} parent=0 // pred_region
    _
  $region41: #{recgnn_forward.5} parent=0 // pred_fallthru
    _
  // Predicated region
  $region42: #{recgnn_forward.5} parent=0 // pred_check
    _
  $region43: #{recgnn_forward.5} parent=0 // pred_check_branch
    %42 = sbr.rel (0) target = $region45
  $region44: #{recgnn_forward.5} parent=0 // pred_region
    _
  $region45: #{recgnn_forward.5} parent=0 // pred_fallthru
    _
  // Predicated region
  $region46: #{recgnn_forward.5} parent=0 // pred_check
    _
  $region47: #{recgnn_forward.5} parent=0 // pred_check_branch
    %44 = sbr.rel (0) target = $region49
  $region48: #{recgnn_forward.5} parent=0 // pred_region
    _
  $region49: #{recgnn_forward.5} parent=0 // pred_fallthru
    _
  // Predicated region
  $region50: #{recgnn_forward.5} parent=0 // pred_check
    _
  $region51: #{recgnn_forward.5} parent=0 // pred_check_branch
    %46 = sbr.rel (0) target = $region53
  $region52: #{recgnn_forward.5} parent=0 // pred_region
    _
  $region53: #{recgnn_forward.5} parent=0 // pred_fallthru
    _
  // Predicated region
  $region54: #{recgnn_forward.5} parent=0 // pred_check
    _
  $region55: #{recgnn_forward.5} parent=0 // pred_check_branch
    %48 = sbr.rel (0) target = $region57
  $region56: #{recgnn_forward.5} parent=0 // pred_region
    _
  $region57: #{recgnn_forward.5} parent=0 // pred_fallthru
    _
  // Predicated region
  $region58: #{recgnn_forward.5} parent=0 // pred_check
    _
  $region59: #{recgnn_forward.5} parent=0 // pred_check_branch
    %50 = sbr.rel (0) target = $region61
  $region60: #{recgnn_forward.5} parent=0 // pred_region
    _
  $region61: #{recgnn_forward.5} parent=0 // pred_fallthru
    _
  %s52 = sld [smem:[#allocation2]]
  %v53 = vld [vmem:[%s2] sm:$0xff]
  %v54 = vld [vmem:[%s2 + $0x8] sm:$0xff]
  %v55 = vld [vmem:[%s2 + $0x10] sm:$0xff]
  %v56 = vld [vmem:[%s2 + $0x18] sm:$0xff]
  %v57 = vadd.f32 %v53, %v55
  %v58 = vadd.f32 %v54, %v56
  %v59 = vld [vmem:[%s1] sm:$0xff]
  %v60 = vld [vmem:[%s1 + $0x8] sm:$0xff]
  %v61 = vstv %s52
  %v62 = vmul.f32 %v61, %v59
  %v63 = vmul.f32 %v61, %v60
  %v64 = vadd.f32 %v62, %v57
  %v65 = vadd.f32 %v63, %v58
  %v66 = vpack.c.bf16 %v65, %v64
  %v67 = vld [vmem:[%s3] sm:$0xf]
  %v68 = vld [vmem:[%s3 + $0x4] sm:$0xf]
  %v69 = vld [vmem:[%s3 + $0x8] sm:$0xf]
  %v70 = vld [vmem:[%s3 + $0xc] sm:$0xf]
  %v71 = vld [vmem:[%s3 + $0x10] sm:$0xf]
  %v72 = vld [vmem:[%s3 + $0x14] sm:$0xf]
  %v73 = vld [vmem:[%s3 + $0x18] sm:$0xf]
  %v74 = vld [vmem:[%s3 + $0x1c] sm:$0xf]
  %v75 = vld [vmem:[%s3 + $0x20] sm:$0xf]
  %v76 = vld [vmem:[%s3 + $0x24] sm:$0xf]
  %v77 = vld [vmem:[%s3 + $0x28] sm:$0xf]
  %v78 = vld [vmem:[%s3 + $0x2c] sm:$0xf]
  %v79 = vld [vmem:[%s3 + $0x30] sm:$0xf]
  %v80 = vld [vmem:[%s3 + $0x34] sm:$0xf]
  %v81 = vld [vmem:[%s3 + $0x38] sm:$0xf]
  %v82 = vld [vmem:[%s3 + $0x3c] sm:$0xf]
  %v83 = vld [vmem:[%s4] sm:$0x1]
  %v85 = vlaneseq
  %v86 = vshrl.u32 %v85, 7
  %v87 = vsub.s32 0, %v86
  %v88 = vrot.slane %v83, %v87
  %v106 = vunpack.c.l.b16 %v67
  %v107 = vunpack.c.l.b16 %v68
  %v108 = vunpack.c.l.b16 %v69
  %v109 = vunpack.c.l.b16 %v70
  %v110 = vunpack.c.l.b16 %v71
  %v111 = vunpack.c.l.b16 %v72
  %v112 = vunpack.c.l.b16 %v73
  %v113 = vunpack.c.l.b16 %v74
  %v114 = vunpack.c.l.b16 %v75
  %v115 = vunpack.c.l.b16 %v76
  %v116 = vunpack.c.l.b16 %v77
  %v117 = vunpack.c.l.b16 %v78
  %v118 = vunpack.c.l.b16 %v79
  %v119 = vunpack.c.l.b16 %v80
  %v120 = vunpack.c.l.b16 %v81
  %v121 = vunpack.c.l.b16 %v82
  %v122 = vpack.c.b16 %v107, %v106
  %v123 = vpack.c.b16 %v109, %v108
  %v124 = vpack.c.b16 %v111, %v110
  %v125 = vpack.c.b16 %v113, %v112
  %v126 = vpack.c.b16 %v115, %v114
  %v127 = vpack.c.b16 %v117, %v116
  %v128 = vpack.c.b16 %v119, %v118
  %v129 = vpack.c.b16 %v121, %v120
  %138 = vmatprep.subr.bf16.mxu0 0
  %139 = vmatpush1.bf16.msra.mxu0 %v122
  %140 = vmatprep.subr.bf16.mxu0 0
  %141 = vmatpush1.bf16.msra.mxu0 %v123
  %142 = vmatprep.subr.bf16.mxu0 0
  %143 = vmatpush1.bf16.msra.mxu0 %v124
  %144 = vmatprep.subr.bf16.mxu0 0
  %145 = vmatpush1.bf16.msra.mxu0 %v125
  %146 = vmatprep.subr.bf16.mxu0 0
  %147 = vmatpush1.bf16.msra.mxu0 %v126
  %148 = vmatprep.subr.bf16.mxu0 0
  %149 = vmatpush1.bf16.msra.mxu0 %v127
  %150 = vmatprep.subr.bf16.mxu0 0
  %151 = vmatpush1.bf16.msra.mxu0 %v128
  %152 = vmatprep.subr.bf16.mxu0 0
  %153 = vmatpush1.bf16.msra.mxu0 %v129
  %154 = vmatprep.subr.bf16.mxu0 0
  %155 = vmatpush1.bf16.msra.mxu0 0
  %156 = vmatprep.subr.bf16.mxu0 0
  %157 = vmatpush1.bf16.msra.mxu0 0
  %158 = vmatprep.subr.bf16.mxu0 0
  %159 = vmatpush1.bf16.msra.mxu0 0
  %160 = vmatprep.subr.bf16.mxu0 0
  %161 = vmatpush1.bf16.msra.mxu0 0
  %162 = vmatprep.subr.bf16.mxu0 0
  %163 = vmatpush1.bf16.msra.mxu0 0
  %164 = vmatprep.subr.bf16.mxu0 0
  %165 = vmatpush1.bf16.msra.mxu0 0
  %166 = vmatprep.subr.bf16.mxu0 0
  %167 = vmatpush1.bf16.msra.mxu0 0
  %168 = vmatprep.subr.bf16.mxu0 0
  %169 = vmatpush1.bf16.msra.mxu0 0
  %170 = vmatprep.mubr.bf16.mxu0 0
  %171 = vmatmul.mubr.bf16.gmra.mrb[0].mxu0 %v66
  %v172 = vpop.f32.mrb[0].mxu0
  %v173 = vadd.f32 %v88, %v172
  %v174 = vpop.f32.mrb[0].mxu0
  %v175 = vpop.f32.mrb[0].mxu0
  %v176 = vadd.f32 %v88, %v175
  %v177 = vpop.f32.mrb[0].mxu0
  %178 = vdwg.mxu0
  %v179 = vmax.f32 %v173, 0.0
  %v180 = vmax.f32 %v176, 0.0
  %v181 = vpack.c.bf16 %v180, %v179
  %v182 = vld [vmem:[%s5] sm:$0xf]
  %v183 = vld [vmem:[%s5 + $0x4] sm:$0xf]
  %v184 = vld [vmem:[%s5 + $0x8] sm:$0xf]
  %v185 = vld [vmem:[%s5 + $0xc] sm:$0xf]
  %v186 = vld [vmem:[%s5 + $0x10] sm:$0xf]
  %v187 = vld [vmem:[%s5 + $0x14] sm:$0xf]
  %v188 = vld [vmem:[%s5 + $0x18] sm:$0xf]
  %v189 = vld [vmem:[%s5 + $0x1c] sm:$0xf]
  %v190 = vld [vmem:[%s5 + $0x20] sm:$0xf]
  %v191 = vld [vmem:[%s5 + $0x24] sm:$0xf]
  %v192 = vld [vmem:[%s5 + $0x28] sm:$0xf]
  %v193 = vld [vmem:[%s5 + $0x2c] sm:$0xf]
  %v194 = vld [vmem:[%s5 + $0x30] sm:$0xf]
  %v195 = vld [vmem:[%s5 + $0x34] sm:$0xf]
  %v196 = vld [vmem:[%s5 + $0x38] sm:$0xf]
  %v197 = vld [vmem:[%s5 + $0x3c] sm:$0xf]
  %v198 = vld [vmem:[%s6] sm:$0x1]
  %v200 = vlaneseq
  %v201 = vshrl.u32 %v200, 7
  %v202 = vsub.s32 0, %v201
  %v203 = vrot.slane %v198, %v202
  %v221 = vunpack.c.l.b16 %v182
  %v222 = vunpack.c.l.b16 %v183
  %v223 = vunpack.c.l.b16 %v184
  %v224 = vunpack.c.l.b16 %v185
  %v225 = vunpack.c.l.b16 %v186
  %v226 = vunpack.c.l.b16 %v187
  %v227 = vunpack.c.l.b16 %v188
  %v228 = vunpack.c.l.b16 %v189
  %v229 = vunpack.c.l.b16 %v190
  %v230 = vunpack.c.l.b16 %v191
  %v231 = vunpack.c.l.b16 %v192
  %v232 = vunpack.c.l.b16 %v193
  %v233 = vunpack.c.l.b16 %v194
  %v234 = vunpack.c.l.b16 %v195
  %v235 = vunpack.c.l.b16 %v196
  %v236 = vunpack.c.l.b16 %v197
  %v237 = vpack.c.b16 %v222, %v221
  %v238 = vpack.c.b16 %v224, %v223
  %v239 = vpack.c.b16 %v226, %v225
  %v240 = vpack.c.b16 %v228, %v227
  %v241 = vpack.c.b16 %v230, %v229
  %v242 = vpack.c.b16 %v232, %v231
  %v243 = vpack.c.b16 %v234, %v233
  %v244 = vpack.c.b16 %v236, %v235
  %253 = vmatprep.subr.bf16.mxu0 0
  %254 = vmatpush1.bf16.msra.mxu0 %v237
  %255 = vmatprep.subr.bf16.mxu0 0
  %256 = vmatpush1.bf16.msra.mxu0 %v238
  %257 = vmatprep.subr.bf16.mxu0 0
  %258 = vmatpush1.bf16.msra.mxu0 %v239
  %259 = vmatprep.subr.bf16.mxu0 0
  %260 = vmatpush1.bf16.msra.mxu0 %v240
  %261 = vmatprep.subr.bf16.mxu0 0
  %262 = vmatpush1.bf16.msra.mxu0 %v241
  %263 = vmatprep.subr.bf16.mxu0 0
  %264 = vmatpush1.bf16.msra.mxu0 %v242
  %265 = vmatprep.subr.bf16.mxu0 0
  %266 = vmatpush1.bf16.msra.mxu0 %v243
  %267 = vmatprep.subr.bf16.mxu0 0
  %268 = vmatpush1.bf16.msra.mxu0 %v244
  %269 = vmatprep.subr.bf16.mxu0 0
  %270 = vmatpush1.bf16.msra.mxu0 0
  %271 = vmatprep.subr.bf16.mxu0 0
  %272 = vmatpush1.bf16.msra.mxu0 0
  %273 = vmatprep.subr.bf16.mxu0 0
  %274 = vmatpush1.bf16.msra.mxu0 0
  %275 = vmatprep.subr.bf16.mxu0 0
  %276 = vmatpush1.bf16.msra.mxu0 0
  %277 = vmatprep.subr.bf16.mxu0 0
  %278 = vmatpush1.bf16.msra.mxu0 0
  %279 = vmatprep.subr.bf16.mxu0 0
  %280 = vmatpush1.bf16.msra.mxu0 0
  %281 = vmatprep.subr.bf16.mxu0 0
  %282 = vmatpush1.bf16.msra.mxu0 0
  %283 = vmatprep.subr.bf16.mxu0 0
  %284 = vmatpush1.bf16.msra.mxu0 0
  %285 = vmatprep.mubr.bf16.mxu0 0
  %286 = vmatmul.mubr.bf16.gmra.mrb[0].mxu0 %v181
  %v287 = vpop.f32.mrb[0].mxu0
  %v288 = vadd.f32 %v203, %v287
  %v289 = vpop.f32.mrb[0].mxu0
  %v290 = vpop.f32.mrb[0].mxu0
  %v291 = vadd.f32 %v203, %v290
  %v292 = vpop.f32.mrb[0].mxu0
  %293 = vdwg.mxu0
  %v294 = vmax.f32 %v288, 0.0
  %v295 = vmax.f32 %v291, 0.0
  %v296 = vpack.c.bf16 %v295, %v294
  %v297 = vld [vmem:[%s7] sm:$0xf]
  %v298 = vld [vmem:[%s7 + $0x4] sm:$0xf]
  %v299 = vld [vmem:[%s7 + $0x8] sm:$0xf]
  %v300 = vld [vmem:[%s7 + $0xc] sm:$0xf]
  %v301 = vld [vmem:[%s7 + $0x10] sm:$0xf]
  %v302 = vld [vmem:[%s7 + $0x14] sm:$0xf]
  %v303 = vld [vmem:[%s7 + $0x18] sm:$0xf]
  %v304 = vld [vmem:[%s7 + $0x1c] sm:$0xf]
  %v305 = vld [vmem:[%s7 + $0x20] sm:$0xf]
  %v306 = vld [vmem:[%s7 + $0x24] sm:$0xf]
  %v307 = vld [vmem:[%s7 + $0x28] sm:$0xf]
  %v308 = vld [vmem:[%s7 + $0x2c] sm:$0xf]
  %v309 = vld [vmem:[%s7 + $0x30] sm:$0xf]
  %v310 = vld [vmem:[%s7 + $0x34] sm:$0xf]
  %v311 = vld [vmem:[%s7 + $0x38] sm:$0xf]
  %v312 = vld [vmem:[%s7 + $0x3c] sm:$0xf]
  %v313 = vld [vmem:[%s8] sm:$0x1]
  %v315 = vlaneseq
  %v316 = vshrl.u32 %v315, 7
  %v317 = vsub.s32 0, %v316
  %v318 = vrot.slane %v313, %v317
  %v336 = vunpack.c.l.b16 %v297
  %v337 = vunpack.c.l.b16 %v298
  %v338 = vunpack.c.l.b16 %v299
  %v339 = vunpack.c.l.b16 %v300
  %v340 = vunpack.c.l.b16 %v301
  %v341 = vunpack.c.l.b16 %v302
  %v342 = vunpack.c.l.b16 %v303
  %v343 = vunpack.c.l.b16 %v304
  %v344 = vunpack.c.l.b16 %v305
  %v345 = vunpack.c.l.b16 %v306
  %v346 = vunpack.c.l.b16 %v307
  %v347 = vunpack.c.l.b16 %v308
  %v348 = vunpack.c.l.b16 %v309
  %v349 = vunpack.c.l.b16 %v310
  %v350 = vunpack.c.l.b16 %v311
  %v351 = vunpack.c.l.b16 %v312
  %v352 = vpack.c.b16 %v337, %v336
  %v353 = vpack.c.b16 %v339, %v338
  %v354 = vpack.c.b16 %v341, %v340
  %v355 = vpack.c.b16 %v343, %v342
  %v356 = vpack.c.b16 %v345, %v344
  %v357 = vpack.c.b16 %v347, %v346
  %v358 = vpack.c.b16 %v349, %v348
  %v359 = vpack.c.b16 %v351, %v350
  %368 = vmatprep.subr.bf16.mxu0 0
  %369 = vmatpush1.bf16.msra.mxu0 %v352
  %370 = vmatprep.subr.bf16.mxu0 0
  %371 = vmatpush1.bf16.msra.mxu0 %v353
  %372 = vmatprep.subr.bf16.mxu0 0
  %373 = vmatpush1.bf16.msra.mxu0 %v354
  %374 = vmatprep.subr.bf16.mxu0 0
  %375 = vmatpush1.bf16.msra.mxu0 %v355
  %376 = vmatprep.subr.bf16.mxu0 0
  %377 = vmatpush1.bf16.msra.mxu0 %v356
  %378 = vmatprep.subr.bf16.mxu0 0
  %379 = vmatpush1.bf16.msra.mxu0 %v357
  %380 = vmatprep.subr.bf16.mxu0 0
  %381 = vmatpush1.bf16.msra.mxu0 %v358
  %382 = vmatprep.subr.bf16.mxu0 0
  %383 = vmatpush1.bf16.msra.mxu0 %v359
  %384 = vmatprep.subr.bf16.mxu0 0
  %385 = vmatpush1.bf16.msra.mxu0 0
  %386 = vmatprep.subr.bf16.mxu0 0
  %387 = vmatpush1.bf16.msra.mxu0 0
  %388 = vmatprep.subr.bf16.mxu0 0
  %389 = vmatpush1.bf16.msra.mxu0 0
  %390 = vmatprep.subr.bf16.mxu0 0
  %391 = vmatpush1.bf16.msra.mxu0 0
  %392 = vmatprep.subr.bf16.mxu0 0
  %393 = vmatpush1.bf16.msra.mxu0 0
  %394 = vmatprep.subr.bf16.mxu0 0
  %395 = vmatpush1.bf16.msra.mxu0 0
  %396 = vmatprep.subr.bf16.mxu0 0
  %397 = vmatpush1.bf16.msra.mxu0 0
  %398 = vmatprep.subr.bf16.mxu0 0
  %399 = vmatpush1.bf16.msra.mxu0 0
  %400 = vmatprep.mubr.bf16.mxu0 0
  %401 = vmatmul.mubr.bf16.gmra.mrb[0].mxu0 %v296
  %v402 = vpop.f32.mrb[0].mxu0
  %v403 = vadd.f32 %v318, %v402
  %v404 = vpop.f32.mrb[0].mxu0
  %v405 = vpop.f32.mrb[0].mxu0
  %v406 = vadd.f32 %v318, %v405
  %v407 = vpop.f32.mrb[0].mxu0
  %408 = vdwg.mxu0
  %v409 = vmax.f32 %v403, 0.0
  %v410 = vmax.f32 %v406, 0.0
  %v411 = vpack.c.bf16 %v410, %v409
  %v412 = vld [vmem:[%s9] sm:$0xf]
  %v413 = vld [vmem:[%s9 + $0x4] sm:$0xf]
  %v414 = vld [vmem:[%s9 + $0x8] sm:$0xf]
  %v415 = vld [vmem:[%s9 + $0xc] sm:$0xf]
  %v416 = vld [vmem:[%s9 + $0x10] sm:$0xf]
  %v417 = vld [vmem:[%s9 + $0x14] sm:$0xf]
  %v418 = vld [vmem:[%s9 + $0x18] sm:$0xf]
  %v419 = vld [vmem:[%s9 + $0x1c] sm:$0xf]
  %v420 = vld [vmem:[%s9 + $0x20] sm:$0xf]
  %v421 = vld [vmem:[%s9 + $0x24] sm:$0xf]
  %v422 = vld [vmem:[%s9 + $0x28] sm:$0xf]
  %v423 = vld [vmem:[%s9 + $0x2c] sm:$0xf]
  %v424 = vld [vmem:[%s9 + $0x30] sm:$0xf]
  %v425 = vld [vmem:[%s9 + $0x34] sm:$0xf]
  %v426 = vld [vmem:[%s9 + $0x38] sm:$0xf]
  %v427 = vld [vmem:[%s9 + $0x3c] sm:$0xf]
  %v428 = vld [vmem:[%s10] sm:$0x1]
  %v430 = vlaneseq
  %v431 = vshrl.u32 %v430, 7
  %v432 = vsub.s32 0, %v431
  %v433 = vrot.slane %v428, %v432
  %v451 = vunpack.c.l.b16 %v412
  %v452 = vunpack.c.l.b16 %v413
  %v453 = vunpack.c.l.b16 %v414
  %v454 = vunpack.c.l.b16 %v415
  %v455 = vunpack.c.l.b16 %v416
  %v456 = vunpack.c.l.b16 %v417
  %v457 = vunpack.c.l.b16 %v418
  %v458 = vunpack.c.l.b16 %v419
  %v459 = vunpack.c.l.b16 %v420
  %v460 = vunpack.c.l.b16 %v421
  %v461 = vunpack.c.l.b16 %v422
  %v462 = vunpack.c.l.b16 %v423
  %v463 = vunpack.c.l.b16 %v424
  %v464 = vunpack.c.l.b16 %v425
  %v465 = vunpack.c.l.b16 %v426
  %v466 = vunpack.c.l.b16 %v427
  %v467 = vpack.c.b16 %v452, %v451
  %v468 = vpack.c.b16 %v454, %v453
  %v469 = vpack.c.b16 %v456, %v455
  %v470 = vpack.c.b16 %v458, %v457
  %v471 = vpack.c.b16 %v460, %v459
  %v472 = vpack.c.b16 %v462, %v461
  %v473 = vpack.c.b16 %v464, %v463
  %v474 = vpack.c.b16 %v466, %v465
  %483 = vmatprep.subr.bf16.mxu0 0
  %484 = vmatpush1.bf16.msra.mxu0 %v467
  %485 = vmatprep.subr.bf16.mxu0 0
  %486 = vmatpush1.bf16.msra.mxu0 %v468
  %487 = vmatprep.subr.bf16.mxu0 0
  %488 = vmatpush1.bf16.msra.mxu0 %v469
  %489 = vmatprep.subr.bf16.mxu0 0
  %490 = vmatpush1.bf16.msra.mxu0 %v470
  %491 = vmatprep.subr.bf16.mxu0 0
  %492 = vmatpush1.bf16.msra.mxu0 %v471
  %493 = vmatprep.subr.bf16.mxu0 0
  %494 = vmatpush1.bf16.msra.mxu0 %v472
  %495 = vmatprep.subr.bf16.mxu0 0
  %496 = vmatpush1.bf16.msra.mxu0 %v473
  %497 = vmatprep.subr.bf16.mxu0 0
  %498 = vmatpush1.bf16.msra.mxu0 %v474
  %499 = vmatprep.subr.bf16.mxu0 0
  %500 = vmatpush1.bf16.msra.mxu0 0
  %501 = vmatprep.subr.bf16.mxu0 0
  %502 = vmatpush1.bf16.msra.mxu0 0
  %503 = vmatprep.subr.bf16.mxu0 0
  %504 = vmatpush1.bf16.msra.mxu0 0
  %505 = vmatprep.subr.bf16.mxu0 0
  %506 = vmatpush1.bf16.msra.mxu0 0
  %507 = vmatprep.subr.bf16.mxu0 0
  %508 = vmatpush1.bf16.msra.mxu0 0
  %509 = vmatprep.subr.bf16.mxu0 0
  %510 = vmatpush1.bf16.msra.mxu0 0
  %511 = vmatprep.subr.bf16.mxu0 0
  %512 = vmatpush1.bf16.msra.mxu0 0
  %513 = vmatprep.subr.bf16.mxu0 0
  %514 = vmatpush1.bf16.msra.mxu0 0
  %515 = vmatprep.mubr.bf16.mxu0 0
  %516 = vmatmul.mubr.bf16.gmra.mrb[0].mxu0 %v411
  %v517 = vpop.f32.mrb[0].mxu0
  %v518 = vadd.f32 %v433, %v517
  %v519 = vpop.f32.mrb[0].mxu0
  %v520 = vpop.f32.mrb[0].mxu0
  %v521 = vadd.f32 %v433, %v520
  %v522 = vpop.f32.mrb[0].mxu0
  %523 = vdwg.mxu0
  %v524 = vmax.f32 %v518, 0.0
  %v525 = vmax.f32 %v521, 0.0
  %v526 = vpack.c.bf16 %v525, %v524
  %v527 = vld [vmem:[%s11] sm:$0xf]
  %v528 = vld [vmem:[%s11 + $0x4] sm:$0xf]
  %v529 = vld [vmem:[%s11 + $0x8] sm:$0xf]
  %v530 = vld [vmem:[%s11 + $0xc] sm:$0xf]
  %v531 = vld [vmem:[%s11 + $0x10] sm:$0xf]
  %v532 = vld [vmem:[%s11 + $0x14] sm:$0xf]
  %v533 = vld [vmem:[%s11 + $0x18] sm:$0xf]
  %v534 = vld [vmem:[%s11 + $0x1c] sm:$0xf]
  %v535 = vld [vmem:[%s11 + $0x20] sm:$0xf]
  %v536 = vld [vmem:[%s11 + $0x24] sm:$0xf]
  %v537 = vld [vmem:[%s11 + $0x28] sm:$0xf]
  %v538 = vld [vmem:[%s11 + $0x2c] sm:$0xf]
  %v539 = vld [vmem:[%s11 + $0x30] sm:$0xf]
  %v540 = vld [vmem:[%s11 + $0x34] sm:$0xf]
  %v541 = vld [vmem:[%s11 + $0x38] sm:$0xf]
  %v542 = vld [vmem:[%s11 + $0x3c] sm:$0xf]
  %v543 = vld [vmem:[%s12] sm:$0x1]
  %v545 = vlaneseq
  %v546 = vshrl.u32 %v545, 7
  %v547 = vsub.s32 0, %v546
  %v548 = vrot.slane %v543, %v547
  %v566 = vunpack.c.l.b16 %v527
  %v567 = vunpack.c.l.b16 %v528
  %v568 = vunpack.c.l.b16 %v529
  %v569 = vunpack.c.l.b16 %v530
  %v570 = vunpack.c.l.b16 %v531
  %v571 = vunpack.c.l.b16 %v532
  %v572 = vunpack.c.l.b16 %v533
  %v573 = vunpack.c.l.b16 %v534
  %v574 = vunpack.c.l.b16 %v535
  %v575 = vunpack.c.l.b16 %v536
  %v576 = vunpack.c.l.b16 %v537
  %v577 = vunpack.c.l.b16 %v538
  %v578 = vunpack.c.l.b16 %v539
  %v579 = vunpack.c.l.b16 %v540
  %v580 = vunpack.c.l.b16 %v541
  %v581 = vunpack.c.l.b16 %v542
  %v582 = vpack.c.b16 %v567, %v566
  %v583 = vpack.c.b16 %v569, %v568
  %v584 = vpack.c.b16 %v571, %v570
  %v585 = vpack.c.b16 %v573, %v572
  %v586 = vpack.c.b16 %v575, %v574
  %v587 = vpack.c.b16 %v577, %v576
  %v588 = vpack.c.b16 %v579, %v578
  %v589 = vpack.c.b16 %v581, %v580
  %598 = vmatprep.subr.bf16.mxu0 0
  %599 = vmatpush1.bf16.msra.mxu0 %v582
  %600 = vmatprep.subr.bf16.mxu0 0
  %601 = vmatpush1.bf16.msra.mxu0 %v583
  %602 = vmatprep.subr.bf16.mxu0 0
  %603 = vmatpush1.bf16.msra.mxu0 %v584
  %604 = vmatprep.subr.bf16.mxu0 0
  %605 = vmatpush1.bf16.msra.mxu0 %v585
  %606 = vmatprep.subr.bf16.mxu0 0
  %607 = vmatpush1.bf16.msra.mxu0 %v586
  %608 = vmatprep.subr.bf16.mxu0 0
  %609 = vmatpush1.bf16.msra.mxu0 %v587
  %610 = vmatprep.subr.bf16.mxu0 0
  %611 = vmatpush1.bf16.msra.mxu0 %v588
  %612 = vmatprep.subr.bf16.mxu0 0
  %613 = vmatpush1.bf16.msra.mxu0 %v589
  %614 = vmatprep.subr.bf16.mxu0 0
  %615 = vmatpush1.bf16.msra.mxu0 0
  %616 = vmatprep.subr.bf16.mxu0 0
  %617 = vmatpush1.bf16.msra.mxu0 0
  %618 = vmatprep.subr.bf16.mxu0 0
  %619 = vmatpush1.bf16.msra.mxu0 0
  %620 = vmatprep.subr.bf16.mxu0 0
  %621 = vmatpush1.bf16.msra.mxu0 0
  %622 = vmatprep.subr.bf16.mxu0 0
  %623 = vmatpush1.bf16.msra.mxu0 0
  %624 = vmatprep.subr.bf16.mxu0 0
  %625 = vmatpush1.bf16.msra.mxu0 0
  %626 = vmatprep.subr.bf16.mxu0 0
  %627 = vmatpush1.bf16.msra.mxu0 0
  %628 = vmatprep.subr.bf16.mxu0 0
  %629 = vmatpush1.bf16.msra.mxu0 0
  %630 = vmatprep.mubr.bf16.mxu0 0
  %631 = vmatmul.mubr.bf16.gmra.mrb[0].mxu0 %v526
  %v632 = vpop.f32.mrb[0].mxu0
  %v633 = vadd.f32 %v548, %v632
  %v634 = vpop.f32.mrb[0].mxu0
  %v635 = vpop.f32.mrb[0].mxu0
  %v636 = vadd.f32 %v548, %v635
  %v637 = vpop.f32.mrb[0].mxu0
  %638 = vdwg.mxu0
  %v639 = vmax.f32 %v633, 0.0
  %v640 = vmax.f32 %v636, 0.0
  %v641 = vpack.c.bf16 %v640, %v639
  %v642 = vld [vmem:[%s13] sm:$0xf]
  %v643 = vld [vmem:[%s13 + $0x4] sm:$0xf]
  %v644 = vld [vmem:[%s13 + $0x8] sm:$0xf]
  %v645 = vld [vmem:[%s13 + $0xc] sm:$0xf]
  %v646 = vld [vmem:[%s13 + $0x10] sm:$0xf]
  %v647 = vld [vmem:[%s13 + $0x14] sm:$0xf]
  %v648 = vld [vmem:[%s13 + $0x18] sm:$0xf]
  %v649 = vld [vmem:[%s13 + $0x1c] sm:$0xf]
  %v650 = vld [vmem:[%s13 + $0x20] sm:$0xf]
  %v651 = vld [vmem:[%s13 + $0x24] sm:$0xf]
  %v652 = vld [vmem:[%s13 + $0x28] sm:$0xf]
  %v653 = vld [vmem:[%s13 + $0x2c] sm:$0xf]
  %v654 = vld [vmem:[%s13 + $0x30] sm:$0xf]
  %v655 = vld [vmem:[%s13 + $0x34] sm:$0xf]
  %v656 = vld [vmem:[%s13 + $0x38] sm:$0xf]
  %v657 = vld [vmem:[%s13 + $0x3c] sm:$0xf]
  %v658 = vld [vmem:[%s14] sm:$0x1]
  %v660 = vlaneseq
  %v661 = vshrl.u32 %v660, 7
  %v662 = vsub.s32 0, %v661
  %v663 = vrot.slane %v658, %v662
  %v681 = vunpack.c.l.b16 %v642
  %v682 = vunpack.c.l.b16 %v643
  %v683 = vunpack.c.l.b16 %v644
  %v684 = vunpack.c.l.b16 %v645
  %v685 = vunpack.c.l.b16 %v646
  %v686 = vunpack.c.l.b16 %v647
  %v687 = vunpack.c.l.b16 %v648
  %v688 = vunpack.c.l.b16 %v649
  %v689 = vunpack.c.l.b16 %v650
  %v690 = vunpack.c.l.b16 %v651
  %v691 = vunpack.c.l.b16 %v652
  %v692 = vunpack.c.l.b16 %v653
  %v693 = vunpack.c.l.b16 %v654
  %v694 = vunpack.c.l.b16 %v655
  %v695 = vunpack.c.l.b16 %v656
  %v696 = vunpack.c.l.b16 %v657
  %v697 = vpack.c.b16 %v682, %v681
  %v698 = vpack.c.b16 %v684, %v683
  %v699 = vpack.c.b16 %v686, %v685
  %v700 = vpack.c.b16 %v688, %v687
  %v701 = vpack.c.b16 %v690, %v689
  %v702 = vpack.c.b16 %v692, %v691
  %v703 = vpack.c.b16 %v694, %v693
  %v704 = vpack.c.b16 %v696, %v695
  %713 = vmatprep.subr.bf16.mxu0 0
  %714 = vmatpush1.bf16.msra.mxu0 %v697
  %715 = vmatprep.subr.bf16.mxu0 0
  %716 = vmatpush1.bf16.msra.mxu0 %v698
  %717 = vmatprep.subr.bf16.mxu0 0
  %718 = vmatpush1.bf16.msra.mxu0 %v699
  %719 = vmatprep.subr.bf16.mxu0 0
  %720 = vmatpush1.bf16.msra.mxu0 %v700
  %721 = vmatprep.subr.bf16.mxu0 0
  %722 = vmatpush1.bf16.msra.mxu0 %v701
  %723 = vmatprep.subr.bf16.mxu0 0
  %724 = vmatpush1.bf16.msra.mxu0 %v702
  %725 = vmatprep.subr.bf16.mxu0 0
  %726 = vmatpush1.bf16.msra.mxu0 %v703
  %727 = vmatprep.subr.bf16.mxu0 0
  %728 = vmatpush1.bf16.msra.mxu0 %v704
  %729 = vmatprep.subr.bf16.mxu0 0
  %730 = vmatpush1.bf16.msra.mxu0 0
  %731 = vmatprep.subr.bf16.mxu0 0
  %732 = vmatpush1.bf16.msra.mxu0 0
  %733 = vmatprep.subr.bf16.mxu0 0
  %734 = vmatpush1.bf16.msra.mxu0 0
  %735 = vmatprep.subr.bf16.mxu0 0
  %736 = vmatpush1.bf16.msra.mxu0 0
  %737 = vmatprep.subr.bf16.mxu0 0
  %738 = vmatpush1.bf16.msra.mxu0 0
  %739 = vmatprep.subr.bf16.mxu0 0
  %740 = vmatpush1.bf16.msra.mxu0 0
  %741 = vmatprep.subr.bf16.mxu0 0
  %742 = vmatpush1.bf16.msra.mxu0 0
  %743 = vmatprep.subr.bf16.mxu0 0
  %744 = vmatpush1.bf16.msra.mxu0 0
  %745 = vmatprep.mubr.bf16.mxu0 0
  %746 = vmatmul.mubr.bf16.gmra.mrb[0].mxu0 %v641
  %v747 = vpop.f32.mrb[0].mxu0
  %v748 = vadd.f32 %v663, %v747
  %v749 = vpop.f32.mrb[0].mxu0
  %v750 = vpop.f32.mrb[0].mxu0
  %v751 = vadd.f32 %v663, %v750
  %v752 = vpop.f32.mrb[0].mxu0
  %753 = vdwg.mxu0
  %754 = vst [vmem:[%s15] sm:$0xff] %v748
  %755 = vst [vmem:[%s15 + $0x8] sm:$0xff] %v751
  // Predicated region
  $region62: #{recgnn_forward.5} parent=0 // pred_check
    _
  $region63: #{recgnn_forward.5} parent=0 // pred_check_branch
    %757 = sbr.rel (0) target = $region65
  $region64: #{recgnn_forward.5} parent=0 // pred_region
    _
  $region65: #{recgnn_forward.5} parent=0 // pred_fallthru
    _
  // Predicated region
  $region66: #{recgnn_forward.5} parent=0 // pred_check
    _
  $region67: #{recgnn_forward.5} parent=0 // pred_check_branch
    %759 = sbr.rel (0) target = $region69
  $region68: #{recgnn_forward.5} parent=0 // pred_region
    _
  $region69: #{recgnn_forward.5} parent=0 // pred_fallthru
    _

</llo_original>
